<compile_context>
chip_gen: v7x
topology: tpu7x:2x2x1
jax: 0.10.0
libtpu: 0.0.40
codegen_flags: <defaults>
</compile_context>

<pallas_src>
import jax
import jax.numpy as jnp
from jax.experimental import pallas as pl
from jax.experimental.pallas import tpu as pltpu


def _irnn_kernel(x_ref, w_ih_ref, bias_ref, whh_ref, who_ref, b_ho_ref,
                 out_ref):
    """One batch-tile grid step: full IRNN recurrence + h2o + log_softmax.

    Transposed layout (batch in lanes, hidden/classes in sublanes):
      x_ref    : (1, seq, batch_tile)          f32   pixels, seq-major
      w_ih_ref : (hidden_pad, 1)               f32   i2h weight column
      bias_ref : (hidden_pad, 1)               f32   b_ih + b_hh
      whh_ref  : (hidden_pad, hidden_pad)      f32   W_hh (not transposed)
      who_ref  : (classes_pad, hidden_pad)     f32   W_ho
      b_ho_ref : (classes_pad, 1)              f32   padded class rows = -1e30
      out_ref  : (1, classes_pad, batch_tile)  f32   log-probs (transposed)
    """
    seq = x_ref.shape[1]
    batch_tile = x_ref.shape[2]
    hidden_pad = whh_ref.shape[0]

    w_ih = w_ih_ref[...]                       # (hidden_pad, 1)
    bias = bias_ref[...]                       # (hidden_pad, 1)

    def one_step(h, x_row):
        # x_row: (1, batch_tile).  The input term is two cheap VPU broadcasts
        # that do not depend on h, so they sit off the serial critical path
        # and hide under the MXU latency of the h2h matmul.
        u = w_ih * x_row + bias                              # (hid, batch)
        hp = jnp.dot(whh_ref[...], h, preferred_element_type=jnp.float32)
        return jnp.maximum(hp + u, 0.0)

    h0 = jnp.zeros((hidden_pad, batch_tile), jnp.float32)
    groups, rem = divmod(seq, 8)

    def group_step(g, h):
        base = pl.multiple_of(g * 8, 8)        # aligned sublane slice start
        x8 = x_ref[0, pl.ds(base, 8), :]       # (8, batch_tile)
        for i in range(8):                     # manual 8x unroll of the chain
            h = one_step(h, x8[i:i + 1, :])
        return h

    h = jax.lax.fori_loop(0, groups, group_step, h0)
    if rem:                                    # static tail: seq % 8 steps
        x_tail = x_ref[0, pl.ds(groups * 8, rem), :]
        for i in range(rem):
            h = one_step(h, x_tail[i:i + 1, :])

    # h2o + log_softmax, still transposed: (classes_pad, batch_tile).
    logits = jnp.dot(who_ref[...], h, preferred_element_type=jnp.float32)
    logits = logits + b_ho_ref[...]            # padded classes -> -1e30
    m = jnp.max(logits, axis=0, keepdims=True)
    shifted = logits - m
    lse = jnp.log(jnp.sum(jnp.exp(shifted), axis=0, keepdims=True))
    out_ref[0, :, :] = shifted - lse


def _round_up(x, m):
    return ((x + m - 1) // m) * m


@jax.jit
def mnist_irnn_forward(x_nchw, params):
    batch = x_nchw.shape[0]
    hidden = params["w_hh"].shape[0]
    num_classes = params["w_ho"].shape[0]

    x_flat = x_nchw.reshape(batch, -1).astype(jnp.float32)       # (B, T)
    seq = x_flat.shape[1]

    LANE, SUB = 128, 8
    hidden_pad = _round_up(hidden, LANE)       # keep at one 128-wide MXU pass
    classes_pad = _round_up(num_classes, LANE)

    # Batch tiling: >= 2 tiles once batch >= 16 so v7x's two TensorCores both
    # get work on the "parallel" axis; tiles capped at 128 rows so the
    # footprint also fits v7x's smaller VMEM (v5e/v6e just run tiles serially).
    b8 = _round_up(batch, SUB)
    if b8 <= SUB:
        batch_tile = b8
    else:
        batch_tile = min(128, _round_up((b8 + 1) // 2, SUB))
    num_tiles = -(-b8 // batch_tile)
    batch_pad = num_tiles * batch_tile

    f32 = jnp.float32
    # Zero padding keeps padded hidden rows exactly 0 through the recurrence;
    # padded class rows get a -1e30 bias so they vanish from the softmax.
    w_ih_col = jnp.zeros((hidden_pad, 1), f32).at[:hidden, 0].set(
        params["w_ih"].reshape(-1).astype(f32))
    bias_col = jnp.zeros((hidden_pad, 1), f32).at[:hidden, 0].set(
        (params["b_ih"] + params["b_hh"]).astype(f32))
    whh = jnp.zeros((hidden_pad, hidden_pad), f32).at[:hidden, :hidden].set(
        params["w_hh"].astype(f32))
    who = jnp.zeros((classes_pad, hidden_pad), f32).at[
        :num_classes, :hidden].set(params["w_ho"].astype(f32))
    b_ho_col = jnp.full((classes_pad, 1), -1e30, f32).at[:num_classes, 0].set(
        params["b_ho"].astype(f32))

    # Stream only the pixels (~batch*seq*4 bytes): (num_tiles, seq, batch_tile)
    # so the kernel reads aligned 8-timestep sublane slices per batch tile.
    x_pad = jnp.zeros((batch_pad, seq), f32).at[:batch].set(x_flat)
    x3 = x_pad.reshape(num_tiles, batch_tile, seq).transpose(0, 2, 1)

    # VMEM budget: double-buffered x tile + weights + out tile — all tiny now.
    needed = (2 * seq * batch_tile * 4
              + 2 * (hidden_pad * hidden_pad + classes_pad * hidden_pad) * 4
              + 2 * (2 * hidden_pad + classes_pad) * LANE * 4
              + 2 * classes_pad * batch_tile * 4)
    vmem_limit = int(min(max(4 * needed, 8 * 1024 * 1024), 48 * 1024 * 1024))

    out_t = pl.pallas_call(
        _irnn_kernel,
        out_shape=jax.ShapeDtypeStruct((num_tiles, classes_pad, batch_tile),
                                       jnp.float32),
        grid_spec=pltpu.PrefetchScalarGridSpec(
            num_scalar_prefetch=0,
            grid=(num_tiles,),
            in_specs=[
                pl.BlockSpec((1, seq, batch_tile), lambda b: (b, 0, 0)),
                pl.BlockSpec((hidden_pad, 1), lambda b: (0, 0)),
                pl.BlockSpec((hidden_pad, 1), lambda b: (0, 0)),
                pl.BlockSpec((hidden_pad, hidden_pad), lambda b: (0, 0)),
                pl.BlockSpec((classes_pad, hidden_pad), lambda b: (0, 0)),
                pl.BlockSpec((classes_pad, 1), lambda b: (0, 0)),
            ],
            out_specs=pl.BlockSpec((1, classes_pad, batch_tile),
                                   lambda b: (b, 0, 0)),
        ),
        compiler_params=pltpu.CompilerParams(
            dimension_semantics=("parallel",),
            vmem_limit_bytes=vmem_limit),
    )(x3, w_ih_col, bias_col, whh, who, b_ho_col)

    # Un-transpose the (classes, batch) tiles back to (batch, classes).
    out = out_t.transpose(0, 2, 1).reshape(batch_pad, classes_pad)
    return out[:batch, :num_classes]


def mnist_irnn_reference(x_nchw, params):
    """Pure-JAX f32 reference (mirrors the PyTorch forward)."""
    batch = x_nchw.shape[0]
    hidden = params["w_hh"].shape[0]
    x = x_nchw.reshape(batch, -1).astype(jnp.float32)            # (B, T)
    w_ih = params["w_ih"].reshape(-1)

    def step(h, x_t):
        hp = h @ params["w_hh"].T + params["b_hh"]
        ip = x_t[:, None] * w_ih[None, :] + params["b_ih"]
        return jnp.maximum(hp + ip, 0.0), None

    h0 = jnp.zeros((batch, hidden), jnp.float32)
    h, _ = jax.lax.scan(step, h0, x.T)
    logits = h @ params["w_ho"].T + params["b_ho"]
    return jax.nn.log_softmax(logits, axis=1)


def init_params(key, hidden_size, num_classes=10):
    """Matches the torch module init: i2h, h2o ~ N(0, 0.001), zero bias;
       h2h = identity, zero bias."""
    k1, k2 = jax.random.split(key)
    return {
        "w_ih": jax.random.normal(k1, (hidden_size, 1), jnp.float32) * 0.001,
        "b_ih": jnp.zeros((hidden_size,), jnp.float32),
        "w_hh": jnp.eye(hidden_size, dtype=jnp.float32),
        "b_hh": jnp.zeros((hidden_size,), jnp.float32),
        "w_ho": jax.random.normal(k2, (num_classes, hidden_size),
                                  jnp.float32) * 0.001,
        "b_ho": jnp.zeros((num_classes,), jnp.float32),
    }


if __name__ == "__main__":
    hidden_size = 32
    num_classes = 10
    batch, C, H, W = 2, 1, 8, 8          # small MNIST-like input -> seq = 64

    key = jax.random.PRNGKey(0)
    kx, kp = jax.random.split(key)
    x = jax.random.normal(kx, (batch, C, H, W), jnp.float32)
    params = init_params(kp, hidden_size, num_classes)

    out = mnist_irnn_forward(x, params)
    out = jax.block_until_ready(out)

    assert out.shape == (batch, num_classes)
    # log_softmax rows must exponentiate-and-sum to 1.
    assert jnp.allclose(jnp.sum(jnp.exp(out), axis=1), 1.0, atol=1e-4)
    # Match the pure-JAX f32 reference (kernel is f32 end-to-end now).
    ref = mnist_irnn_reference(x, params)
    assert float(jnp.max(jnp.abs(out - ref))) < 1e-2
    print("KERNEL_OK")
</pallas_src>

<mosaic_0001>
module attributes {stable_mosaic.version = 11 : i64} {
  func.func @_irnn_kernel(%arg0: i32, %arg1: memref<1x64x8xf32, #tpu.memory_space<vmem>>, %arg2: memref<128x1xf32, #tpu.memory_space<vmem>>, %arg3: memref<128x1xf32, #tpu.memory_space<vmem>>, %arg4: memref<128x128xf32, #tpu.memory_space<vmem>>, %arg5: memref<128x128xf32, #tpu.memory_space<vmem>>, %arg6: memref<128x1xf32, #tpu.memory_space<vmem>>, %arg7: memref<1x128x8xf32, #tpu.memory_space<vmem>>) attributes {dimension_semantics = [#tpu.dimension_semantics<parallel>], iteration_bounds = array<i64: 1>, scalar_prefetch = 0 : i64, scratch_operands = 0 : i64, tpu.core_type = #tpu.core_type<tc>, window_params = [{transform_indices = @transform_0, window_bounds = array<i64: 1, 64, 8>}, {pipeline_mode = #tpu.pipeline_mode<synchronous>, transform_indices = @transform_1, window_bounds = array<i64: 128, 1>}, {pipeline_mode = #tpu.pipeline_mode<synchronous>, transform_indices = @transform_2, window_bounds = array<i64: 128, 1>}, {pipeline_mode = #tpu.pipeline_mode<synchronous>, transform_indices = @transform_3, window_bounds = array<i64: 128, 128>}, {pipeline_mode = #tpu.pipeline_mode<synchronous>, transform_indices = @transform_4, window_bounds = array<i64: 128, 128>}, {pipeline_mode = #tpu.pipeline_mode<synchronous>, transform_indices = @transform_5, window_bounds = array<i64: 128, 1>}, {transform_indices = @transform_6, window_bounds = array<i64: 1, 128, 8>}]} {
    %c0 = arith.constant 0 : index
    %c0_0 = arith.constant 0 : index
    %0 = vector.load %arg2[%c0, %c0_0] : memref<128x1xf32, #tpu.memory_space<vmem>>, vector<128x1xf32>
    %c0_1 = arith.constant 0 : index
    %c0_2 = arith.constant 0 : index
    %1 = vector.load %arg3[%c0_1, %c0_2] : memref<128x1xf32, #tpu.memory_space<vmem>>, vector<128x1xf32>
    %cst = arith.constant 0.000000e+00 : f32
    %2 = vector.broadcast %cst : f32 to vector<128x8xf32>
    %c0_i32 = arith.constant 0 : i32
    %c8_i32 = arith.constant 8 : i32
    %3 = arith.addi %c0_i32, %c8_i32 : i32
    %c1_i32 = arith.constant 1 : i32
    %4 = scf.for %arg8 = %c0_i32 to %3 step %c1_i32 iter_args(%arg9 = %2) -> (vector<128x8xf32>)  : i32 {
      %c8_i32_14 = arith.constant 8 : i32
      %23 = arith.muli %arg8, %c8_i32_14 : i32
      %24 = tpu.assume_multiple %23, 8 : i32
      %c0_15 = arith.constant 0 : index
      %25 = arith.index_cast %24 : i32 to index
      %c0_16 = arith.constant 0 : index
      %26 = vector.load %arg1[%c0_15, %25, %c0_16] : memref<1x64x8xf32, #tpu.memory_space<vmem>>, vector<1x8x8xf32>
      %27 = vector.shape_cast %26 : vector<1x8x8xf32> to vector<8x8xf32>
      %28 = vector.extract_strided_slice %27 {offsets = [0, 0], sizes = [1, 8], strides = [1, 1]} : vector<8x8xf32> to vector<1x8xf32>
      %29 = vector.broadcast %0 : vector<128x1xf32> to vector<128x8xf32>
      %30 = vector.broadcast %28 : vector<1x8xf32> to vector<128x8xf32>
      %31 = arith.mulf %29, %30 : vector<128x8xf32>
      %32 = vector.broadcast %1 : vector<128x1xf32> to vector<128x8xf32>
      %33 = arith.addf %31, %32 : vector<128x8xf32>
      %c0_17 = arith.constant 0 : index
      %c0_18 = arith.constant 0 : index
      %34 = vector.load %arg4[%c0_17, %c0_18] : memref<128x128xf32, #tpu.memory_space<vmem>>, vector<128x128xf32>
      %cst_19 = arith.constant dense<0.000000e+00> : vector<128x8xf32>
      %35 = tpu.matmul %34, %arg9, %cst_19 {dimension_numbers = #tpu.dot_dimension_numbers<[1], [0], [0], [1], [0, 0, 1, 1], [], []>} : vector<128x128xf32>, vector<128x8xf32>, vector<128x8xf32> -> vector<128x8xf32>
      %36 = arith.addf %35, %33 : vector<128x8xf32>
      %cst_20 = arith.constant 0.000000e+00 : f32
      %37 = vector.broadcast %cst_20 : f32 to vector<128x8xf32>
      %38 = arith.maximumf %36, %37 : vector<128x8xf32>
      %39 = vector.extract_strided_slice %27 {offsets = [1, 0], sizes = [1, 8], strides = [1, 1]} : vector<8x8xf32> to vector<1x8xf32>
      %40 = vector.broadcast %0 : vector<128x1xf32> to vector<128x8xf32>
      %41 = vector.broadcast %39 : vector<1x8xf32> to vector<128x8xf32>
      %42 = arith.mulf %40, %41 : vector<128x8xf32>
      %43 = vector.broadcast %1 : vector<128x1xf32> to vector<128x8xf32>
      %44 = arith.addf %42, %43 : vector<128x8xf32>
      %c0_21 = arith.constant 0 : index
      %c0_22 = arith.constant 0 : index
      %45 = vector.load %arg4[%c0_21, %c0_22] : memref<128x128xf32, #tpu.memory_space<vmem>>, vector<128x128xf32>
      %cst_23 = arith.constant dense<0.000000e+00> : vector<128x8xf32>
      %46 = tpu.matmul %45, %38, %cst_23 {dimension_numbers = #tpu.dot_dimension_numbers<[1], [0], [0], [1], [0, 0, 1, 1], [], []>} : vector<128x128xf32>, vector<128x8xf32>, vector<128x8xf32> -> vector<128x8xf32>
      %47 = arith.addf %46, %44 : vector<128x8xf32>
      %cst_24 = arith.constant 0.000000e+00 : f32
      %48 = vector.broadcast %cst_24 : f32 to vector<128x8xf32>
      %49 = arith.maximumf %47, %48 : vector<128x8xf32>
      %50 = vector.extract_strided_slice %27 {offsets = [2, 0], sizes = [1, 8], strides = [1, 1]} : vector<8x8xf32> to vector<1x8xf32>
      %51 = vector.broadcast %0 : vector<128x1xf32> to vector<128x8xf32>
      %52 = vector.broadcast %50 : vector<1x8xf32> to vector<128x8xf32>
      %53 = arith.mulf %51, %52 : vector<128x8xf32>
      %54 = vector.broadcast %1 : vector<128x1xf32> to vector<128x8xf32>
      %55 = arith.addf %53, %54 : vector<128x8xf32>
      %c0_25 = arith.constant 0 : index
      %c0_26 = arith.constant 0 : index
      %56 = vector.load %arg4[%c0_25, %c0_26] : memref<128x128xf32, #tpu.memory_space<vmem>>, vector<128x128xf32>
      %cst_27 = arith.constant dense<0.000000e+00> : vector<128x8xf32>
      %57 = tpu.matmul %56, %49, %cst_27 {dimension_numbers = #tpu.dot_dimension_numbers<[1], [0], [0], [1], [0, 0, 1, 1], [], []>} : vector<128x128xf32>, vector<128x8xf32>, vector<128x8xf32> -> vector<128x8xf32>
      %58 = arith.addf %57, %55 : vector<128x8xf32>
      %cst_28 = arith.constant 0.000000e+00 : f32
      %59 = vector.broadcast %cst_28 : f32 to vector<128x8xf32>
      %60 = arith.maximumf %58, %59 : vector<128x8xf32>
      %61 = vector.extract_strided_slice %27 {offsets = [3, 0], sizes = [1, 8], strides = [1, 1]} : vector<8x8xf32> to vector<1x8xf32>
      %62 = vector.broadcast %0 : vector<128x1xf32> to vector<128x8xf32>
      %63 = vector.broadcast %61 : vector<1x8xf32> to vector<128x8xf32>
      %64 = arith.mulf %62, %63 : vector<128x8xf32>
      %65 = vector.broadcast %1 : vector<128x1xf32> to vector<128x8xf32>
      %66 = arith.addf %64, %65 : vector<128x8xf32>
      %c0_29 = arith.constant 0 : index
      %c0_30 = arith.constant 0 : index
      %67 = vector.load %arg4[%c0_29, %c0_30] : memref<128x128xf32, #tpu.memory_space<vmem>>, vector<128x128xf32>
      %cst_31 = arith.constant dense<0.000000e+00> : vector<128x8xf32>
      %68 = tpu.matmul %67, %60, %cst_31 {dimension_numbers = #tpu.dot_dimension_numbers<[1], [0], [0], [1], [0, 0, 1, 1], [], []>} : vector<128x128xf32>, vector<128x8xf32>, vector<128x8xf32> -> vector<128x8xf32>
      %69 = arith.addf %68, %66 : vector<128x8xf32>
      %cst_32 = arith.constant 0.000000e+00 : f32
      %70 = vector.broadcast %cst_32 : f32 to vector<128x8xf32>
      %71 = arith.maximumf %69, %70 : vector<128x8xf32>
      %72 = vector.extract_strided_slice %27 {offsets = [4, 0], sizes = [1, 8], strides = [1, 1]} : vector<8x8xf32> to vector<1x8xf32>
      %73 = vector.broadcast %0 : vector<128x1xf32> to vector<128x8xf32>
      %74 = vector.broadcast %72 : vector<1x8xf32> to vector<128x8xf32>
      %75 = arith.mulf %73, %74 : vector<128x8xf32>
      %76 = vector.broadcast %1 : vector<128x1xf32> to vector<128x8xf32>
      %77 = arith.addf %75, %76 : vector<128x8xf32>
      %c0_33 = arith.constant 0 : index
      %c0_34 = arith.constant 0 : index
      %78 = vector.load %arg4[%c0_33, %c0_34] : memref<128x128xf32, #tpu.memory_space<vmem>>, vector<128x128xf32>
      %cst_35 = arith.constant dense<0.000000e+00> : vector<128x8xf32>
      %79 = tpu.matmul %78, %71, %cst_35 {dimension_numbers = #tpu.dot_dimension_numbers<[1], [0], [0], [1], [0, 0, 1, 1], [], []>} : vector<128x128xf32>, vector<128x8xf32>, vector<128x8xf32> -> vector<128x8xf32>
      %80 = arith.addf %79, %77 : vector<128x8xf32>
      %cst_36 = arith.constant 0.000000e+00 : f32
      %81 = vector.broadcast %cst_36 : f32 to vector<128x8xf32>
      %82 = arith.maximumf %80, %81 : vector<128x8xf32>
      %83 = vector.extract_strided_slice %27 {offsets = [5, 0], sizes = [1, 8], strides = [1, 1]} : vector<8x8xf32> to vector<1x8xf32>
      %84 = vector.broadcast %0 : vector<128x1xf32> to vector<128x8xf32>
      %85 = vector.broadcast %83 : vector<1x8xf32> to vector<128x8xf32>
      %86 = arith.mulf %84, %85 : vector<128x8xf32>
      %87 = vector.broadcast %1 : vector<128x1xf32> to vector<128x8xf32>
      %88 = arith.addf %86, %87 : vector<128x8xf32>
      %c0_37 = arith.constant 0 : index
      %c0_38 = arith.constant 0 : index
      %89 = vector.load %arg4[%c0_37, %c0_38] : memref<128x128xf32, #tpu.memory_space<vmem>>, vector<128x128xf32>
      %cst_39 = arith.constant dense<0.000000e+00> : vector<128x8xf32>
      %90 = tpu.matmul %89, %82, %cst_39 {dimension_numbers = #tpu.dot_dimension_numbers<[1], [0], [0], [1], [0, 0, 1, 1], [], []>} : vector<128x128xf32>, vector<128x8xf32>, vector<128x8xf32> -> vector<128x8xf32>
      %91 = arith.addf %90, %88 : vector<128x8xf32>
      %cst_40 = arith.constant 0.000000e+00 : f32
      %92 = vector.broadcast %cst_40 : f32 to vector<128x8xf32>
      %93 = arith.maximumf %91, %92 : vector<128x8xf32>
      %94 = vector.extract_strided_slice %27 {offsets = [6, 0], sizes = [1, 8], strides = [1, 1]} : vector<8x8xf32> to vector<1x8xf32>
      %95 = vector.broadcast %0 : vector<128x1xf32> to vector<128x8xf32>
      %96 = vector.broadcast %94 : vector<1x8xf32> to vector<128x8xf32>
      %97 = arith.mulf %95, %96 : vector<128x8xf32>
      %98 = vector.broadcast %1 : vector<128x1xf32> to vector<128x8xf32>
      %99 = arith.addf %97, %98 : vector<128x8xf32>
      %c0_41 = arith.constant 0 : index
      %c0_42 = arith.constant 0 : index
      %100 = vector.load %arg4[%c0_41, %c0_42] : memref<128x128xf32, #tpu.memory_space<vmem>>, vector<128x128xf32>
      %cst_43 = arith.constant dense<0.000000e+00> : vector<128x8xf32>
      %101 = tpu.matmul %100, %93, %cst_43 {dimension_numbers = #tpu.dot_dimension_numbers<[1], [0], [0], [1], [0, 0, 1, 1], [], []>} : vector<128x128xf32>, vector<128x8xf32>, vector<128x8xf32> -> vector<128x8xf32>
      %102 = arith.addf %101, %99 : vector<128x8xf32>
      %cst_44 = arith.constant 0.000000e+00 : f32
      %103 = vector.broadcast %cst_44 : f32 to vector<128x8xf32>
      %104 = arith.maximumf %102, %103 : vector<128x8xf32>
      %105 = vector.extract_strided_slice %27 {offsets = [7, 0], sizes = [1, 8], strides = [1, 1]} : vector<8x8xf32> to vector<1x8xf32>
      %106 = vector.broadcast %0 : vector<128x1xf32> to vector<128x8xf32>
      %107 = vector.broadcast %105 : vector<1x8xf32> to vector<128x8xf32>
      %108 = arith.mulf %106, %107 : vector<128x8xf32>
      %109 = vector.broadcast %1 : vector<128x1xf32> to vector<128x8xf32>
      %110 = arith.addf %108, %109 : vector<128x8xf32>
      %c0_45 = arith.constant 0 : index
      %c0_46 = arith.constant 0 : index
      %111 = vector.load %arg4[%c0_45, %c0_46] : memref<128x128xf32, #tpu.memory_space<vmem>>, vector<128x128xf32>
      %cst_47 = arith.constant dense<0.000000e+00> : vector<128x8xf32>
      %112 = tpu.matmul %111, %104, %cst_47 {dimension_numbers = #tpu.dot_dimension_numbers<[1], [0], [0], [1], [0, 0, 1, 1], [], []>} : vector<128x128xf32>, vector<128x8xf32>, vector<128x8xf32> -> vector<128x8xf32>
      %113 = arith.addf %112, %110 : vector<128x8xf32>
      %cst_48 = arith.constant 0.000000e+00 : f32
      %114 = vector.broadcast %cst_48 : f32 to vector<128x8xf32>
      %115 = arith.maximumf %113, %114 : vector<128x8xf32>
      scf.yield %115 : vector<128x8xf32>
    }
    %c8_i32_3 = arith.constant 8 : i32
    %c0_4 = arith.constant 0 : index
    %c0_5 = arith.constant 0 : index
    %5 = vector.load %arg5[%c0_4, %c0_5] : memref<128x128xf32, #tpu.memory_space<vmem>>, vector<128x128xf32>
    %cst_6 = arith.constant dense<0.000000e+00> : vector<128x8xf32>
    %6 = tpu.matmul %5, %4, %cst_6 {dimension_numbers = #tpu.dot_dimension_numbers<[1], [0], [0], [1], [0, 0, 1, 1], [], []>} : vector<128x128xf32>, vector<128x8xf32>, vector<128x8xf32> -> vector<128x8xf32>
    %c0_7 = arith.constant 0 : index
    %c0_8 = arith.constant 0 : index
    %7 = vector.load %arg6[%c0_7, %c0_8] : memref<128x1xf32, #tpu.memory_space<vmem>>, vector<128x1xf32>
    %8 = vector.broadcast %7 : vector<128x1xf32> to vector<128x8xf32>
    %9 = arith.addf %6, %8 : vector<128x8xf32>
    %cst_9 = arith.constant dense<0xFF800000> : vector<8xf32>
    %10 = vector.multi_reduction <maximumf>, %9, %cst_9 [0] : vector<128x8xf32> to vector<8xf32>
    %11 = vector.shape_cast %10 : vector<8xf32> to vector<1x8xf32>
    %12 = vector.broadcast %11 : vector<1x8xf32> to vector<128x8xf32>
    %13 = arith.subf %9, %12 : vector<128x8xf32>
    %14 = math.exp %13 : vector<128x8xf32>
    %cst_10 = arith.constant dense<0.000000e+00> : vector<8xf32>
    %15 = vector.multi_reduction <add>, %14, %cst_10 [0] : vector<128x8xf32> to vector<8xf32>
    %16 = vector.shape_cast %15 : vector<8xf32> to vector<1x8xf32>
    %17 = math.log %16 : vector<1x8xf32>
    %18 = vector.broadcast %17 : vector<1x8xf32> to vector<128x8xf32>
    %19 = arith.subf %13, %18 : vector<128x8xf32>
    %c0_11 = arith.constant 0 : index
    %c0_12 = arith.constant 0 : index
    %c0_13 = arith.constant 0 : index
    %20 = vector.load %arg7[%c0_11, %c0_12, %c0_13] : memref<1x128x8xf32, #tpu.memory_space<vmem>>, vector<1x128x8xf32>
    %21 = vector.shape_cast %20 : vector<1x128x8xf32> to vector<128x8xf32>
    %22 = vector.shape_cast %19 : vector<128x8xf32> to vector<1x128x8xf32>
    tpu.vector_store %arg7[%c0_11, %c0_12, %c0_13], %22 {strides = array<i32>} : memref<1x128x8xf32, #tpu.memory_space<vmem>>, vector<1x128x8xf32>,
    return
  }
  func.func @transform_0(%arg0: i32) -> (i32, i32, i32) {
    %c0_i32 = arith.constant 0 : i32
    %c0_i32_0 = arith.constant 0 : i32
    %c0_i32_1 = arith.constant 0 : i32
    return %arg0, %c0_i32, %c0_i32_0 : i32, i32, i32
  }
  func.func @transform_1(%arg0: i32) -> (i32, i32) {
    %c0_i32 = arith.constant 0 : i32
    %c0_i32_0 = arith.constant 0 : i32
    %c0_i32_1 = arith.constant 0 : i32
    return %c0_i32, %c0_i32_0 : i32, i32
  }
  func.func @transform_2(%arg0: i32) -> (i32, i32) {
    %c0_i32 = arith.constant 0 : i32
    %c0_i32_0 = arith.constant 0 : i32
    %c0_i32_1 = arith.constant 0 : i32
    return %c0_i32, %c0_i32_0 : i32, i32
  }
  func.func @transform_3(%arg0: i32) -> (i32, i32) {
    %c0_i32 = arith.constant 0 : i32
    %c0_i32_0 = arith.constant 0 : i32
    %c0_i32_1 = arith.constant 0 : i32
    return %c0_i32, %c0_i32_0 : i32, i32
  }
  func.func @transform_4(%arg0: i32) -> (i32, i32) {
    %c0_i32 = arith.constant 0 : i32
    %c0_i32_0 = arith.constant 0 : i32
    %c0_i32_1 = arith.constant 0 : i32
    return %c0_i32, %c0_i32_0 : i32, i32
  }
  func.func @transform_5(%arg0: i32) -> (i32, i32) {
    %c0_i32 = arith.constant 0 : i32
    %c0_i32_0 = arith.constant 0 : i32
    %c0_i32_1 = arith.constant 0 : i32
    return %c0_i32, %c0_i32_0 : i32, i32
  }
  func.func @transform_6(%arg0: i32) -> (i32, i32, i32) {
    %c0_i32 = arith.constant 0 : i32
    %c0_i32_0 = arith.constant 0 : i32
    %c0_i32_1 = arith.constant 0 : i32
    return %arg0, %c0_i32, %c0_i32_0 : i32, i32, i32
  }
}

</mosaic_0001>

<llo_original>
// kernel: mnist_irnn_forward.1
$region0: #{mnist_irnn_forward.1}
  #allocation0 [shape = 'u32[]', space=smem, size = 0x4, offset = 0x4, fixed_abs, tag = 'smem constant byte address 0x4 - core index']
  #allocation1 [shape = 'u32[144,128]{1,0:T(1,128)}', space=vmem, size = 0x12000, scoped, tag = 'internal scratch']
  %s0 = inlined_call_operand.vmem [shape: f32[1,64,8], index: 0, kind: input, shape index: {}]
  %s1 = inlined_call_operand.vmem [shape: f32[128,1], index: 1, kind: input, shape index: {}]
  %s2 = inlined_call_operand.vmem [shape: f32[128,1], index: 2, kind: input, shape index: {}]
  %s3 = inlined_call_operand.vmem [shape: f32[128,128], index: 3, kind: input, shape index: {}]
  %s4 = inlined_call_operand.vmem [shape: f32[128,128], index: 4, kind: input, shape index: {}]
  %s5 = inlined_call_operand.vmem [shape: f32[128,1], index: 5, kind: input, shape index: {}]
  %s6 = inlined_call_operand.vmem [shape: f32[1,128,8], index: 6, kind: output, shape index: {}]
  %s7 = sld [smem:[#allocation0]]
  $region41: #{mnist_irnn_forward.1} parent=0
    _
  %s9 = ssub.s32 1, %s7
  %s10 = scalar_select 0, %s9, %s7
  // Predicated region
  $region2: #{mnist_irnn_forward.1} parent=0 // pred_check
    _
  $region3: #{mnist_irnn_forward.1} parent=0 // pred_check_branch
    %12 = sbr.rel (0) target = $region5
  $region4: #{mnist_irnn_forward.1} parent=0 // pred_region
    _
  $region5: #{mnist_irnn_forward.1} parent=0 // pred_fallthru
    _
  // Predicated region
  $region6: #{mnist_irnn_forward.1} parent=0 // pred_check
    _
  $region7: #{mnist_irnn_forward.1} parent=0 // pred_check_branch
    %14 = sbr.rel (0) target = $region9
  $region8: #{mnist_irnn_forward.1} parent=0 // pred_region
    _
  $region9: #{mnist_irnn_forward.1} parent=0 // pred_fallthru
    _
  // Predicated region
  $region10: #{mnist_irnn_forward.1} parent=0 // pred_check
    _
  $region11: #{mnist_irnn_forward.1} parent=0 // pred_check_branch
    %16 = sbr.rel (0) target = $region13
  $region12: #{mnist_irnn_forward.1} parent=0 // pred_region
    _
  $region13: #{mnist_irnn_forward.1} parent=0 // pred_fallthru
    _
  // Predicated region
  $region14: #{mnist_irnn_forward.1} parent=0 // pred_check
    _
  $region15: #{mnist_irnn_forward.1} parent=0 // pred_check_branch
    %18 = sbr.rel (0) target = $region17
  $region16: #{mnist_irnn_forward.1} parent=0 // pred_region
    _
  $region17: #{mnist_irnn_forward.1} parent=0 // pred_fallthru
    _
  // Predicated region
  $region18: #{mnist_irnn_forward.1} parent=0 // pred_check
    _
  $region19: #{mnist_irnn_forward.1} parent=0 // pred_check_branch
    %20 = sbr.rel (0) target = $region21
  $region20: #{mnist_irnn_forward.1} parent=0 // pred_region
    _
  $region21: #{mnist_irnn_forward.1} parent=0 // pred_fallthru
    _
  // Predicated region
  $region22: #{mnist_irnn_forward.1} parent=0 // pred_check
    _
  $region23: #{mnist_irnn_forward.1} parent=0 // pred_check_branch
    %22 = sbr.rel (0) target = $region25
  $region24: #{mnist_irnn_forward.1} parent=0 // pred_region
    _
  $region25: #{mnist_irnn_forward.1} parent=0 // pred_fallthru
    _
  %v23 = vld [vmem:[%s1] sm:$0xff]
  %v24 = vld [vmem:[%s1 + $0x8] sm:$0xff]
  %v25 = vld [vmem:[%s1 + $0x10] sm:$0xff]
  %v26 = vld [vmem:[%s1 + $0x18] sm:$0xff]
  %v27 = vld [vmem:[%s1 + $0x20] sm:$0xff]
  %v28 = vld [vmem:[%s1 + $0x28] sm:$0xff]
  %v29 = vld [vmem:[%s1 + $0x30] sm:$0xff]
  %v30 = vld [vmem:[%s1 + $0x38] sm:$0xff]
  %v31 = vld [vmem:[%s1 + $0x40] sm:$0xff]
  %v32 = vld [vmem:[%s1 + $0x48] sm:$0xff]
  %v33 = vld [vmem:[%s1 + $0x50] sm:$0xff]
  %v34 = vld [vmem:[%s1 + $0x58] sm:$0xff]
  %v35 = vld [vmem:[%s1 + $0x60] sm:$0xff]
  %v36 = vld [vmem:[%s1 + $0x68] sm:$0xff]
  %v37 = vld [vmem:[%s1 + $0x70] sm:$0xff]
  %v38 = vld [vmem:[%s1 + $0x78] sm:$0xff]
  %v39 = vld [vmem:[%s2] sm:$0xff]
  %v40 = vld [vmem:[%s2 + $0x8] sm:$0xff]
  %v41 = vld [vmem:[%s2 + $0x10] sm:$0xff]
  %v42 = vld [vmem:[%s2 + $0x18] sm:$0xff]
  %v43 = vld [vmem:[%s2 + $0x20] sm:$0xff]
  %v44 = vld [vmem:[%s2 + $0x28] sm:$0xff]
  %v45 = vld [vmem:[%s2 + $0x30] sm:$0xff]
  %v46 = vld [vmem:[%s2 + $0x38] sm:$0xff]
  %v47 = vld [vmem:[%s2 + $0x40] sm:$0xff]
  %v48 = vld [vmem:[%s2 + $0x48] sm:$0xff]
  %v49 = vld [vmem:[%s2 + $0x50] sm:$0xff]
  %v50 = vld [vmem:[%s2 + $0x58] sm:$0xff]
  %v51 = vld [vmem:[%s2 + $0x60] sm:$0xff]
  %v52 = vld [vmem:[%s2 + $0x68] sm:$0xff]
  %v53 = vld [vmem:[%s2 + $0x70] sm:$0xff]
  %v54 = vld [vmem:[%s2 + $0x78] sm:$0xff]
  loop: start=0, step=1, limit=8
  $region26: #{mnist_irnn_forward.1} parent=0 // loop_pre_header
    _
  $region27: #{mnist_irnn_forward.1} parent=0 // loop_header
    %s56 = sphi 0, %s60
    %p57 = scmp.ge.s32.totalorder %s56, 8
    %v61 = vphi 0.0, %v1816
    %v62 = vphi 0.0, %v1817
    %v63 = vphi 0.0, %v1818
    %v64 = vphi 0.0, %v1819
    %v65 = vphi 0.0, %v1820
    %v66 = vphi 0.0, %v1821
    %v67 = vphi 0.0, %v1822
    %v68 = vphi 0.0, %v1823
    %v69 = vphi 0.0, %v1824
    %v70 = vphi 0.0, %v1825
    %v71 = vphi 0.0, %v1826
    %v72 = vphi 0.0, %v1827
    %v73 = vphi 0.0, %v1828
    %v74 = vphi 0.0, %v1829
    %v75 = vphi 0.0, %v1830
    %v76 = vphi 0.0, %v1831
  $region28: #{mnist_irnn_forward.1} parent=0 // loop_header_branch
    %59 = sbr.rel (%p57) target = $region32
  $region29: #{mnist_irnn_forward.1} parent=0 // loop_body
    %s77 = smul.u32 %s56, 8
    %s78 = scalar_lea.vmem %s0, %s77
    %v79 = vld [vmem:[%s78] sm:$0xff]
    %81 = vset.pattern.permute.xlu0 0
    %82 = vperm.xlu0 %81, %v23
    %v83 = vpop.permute.xlu0 %82
    %86 = vset.pattern.permute.xlu0 0
    %87 = vperm.xlu0 %86, %v24
    %v88 = vpop.permute.xlu0 %87
    %91 = vset.pattern.permute.xlu0 0
    %92 = vperm.xlu0 %91, %v25
    %v93 = vpop.permute.xlu0 %92
    %96 = vset.pattern.permute.xlu0 0
    %97 = vperm.xlu0 %96, %v26
    %v98 = vpop.permute.xlu0 %97
    %101 = vset.pattern.permute.xlu0 0
    %102 = vperm.xlu0 %101, %v27
    %v103 = vpop.permute.xlu0 %102
    %106 = vset.pattern.permute.xlu0 0
    %107 = vperm.xlu0 %106, %v28
    %v108 = vpop.permute.xlu0 %107
    %111 = vset.pattern.permute.xlu0 0
    %112 = vperm.xlu0 %111, %v29
    %v113 = vpop.permute.xlu0 %112
    %116 = vset.pattern.permute.xlu0 0
    %117 = vperm.xlu0 %116, %v30
    %v118 = vpop.permute.xlu0 %117
    %121 = vset.pattern.permute.xlu0 0
    %122 = vperm.xlu0 %121, %v31
    %v123 = vpop.permute.xlu0 %122
    %126 = vset.pattern.permute.xlu0 0
    %127 = vperm.xlu0 %126, %v32
    %v128 = vpop.permute.xlu0 %127
    %131 = vset.pattern.permute.xlu0 0
    %132 = vperm.xlu0 %131, %v33
    %v133 = vpop.permute.xlu0 %132
    %136 = vset.pattern.permute.xlu0 0
    %137 = vperm.xlu0 %136, %v34
    %v138 = vpop.permute.xlu0 %137
    %141 = vset.pattern.permute.xlu0 0
    %142 = vperm.xlu0 %141, %v35
    %v143 = vpop.permute.xlu0 %142
    %146 = vset.pattern.permute.xlu0 0
    %147 = vperm.xlu0 %146, %v36
    %v148 = vpop.permute.xlu0 %147
    %151 = vset.pattern.permute.xlu0 0
    %152 = vperm.xlu0 %151, %v37
    %v153 = vpop.permute.xlu0 %152
    %156 = vset.pattern.permute.xlu0 0
    %157 = vperm.xlu0 %156, %v38
    %v158 = vpop.permute.xlu0 %157
    %v160 = vlaneseq
    %v161 = vshrl.u32 %v160, 7
    %v162 = vsub.s32 0, %v161
    %v163 = vrot.slane %v79, %v162
    %v164 = vmul.f32 %v83, %v163
    %v165 = vmul.f32 %v88, %v163
    %v166 = vmul.f32 %v93, %v163
    %v167 = vmul.f32 %v98, %v163
    %v168 = vmul.f32 %v103, %v163
    %v169 = vmul.f32 %v108, %v163
    %v170 = vmul.f32 %v113, %v163
    %v171 = vmul.f32 %v118, %v163
    %v172 = vmul.f32 %v123, %v163
    %v173 = vmul.f32 %v128, %v163
    %v174 = vmul.f32 %v133, %v163
    %v175 = vmul.f32 %v138, %v163
    %v176 = vmul.f32 %v143, %v163
    %v177 = vmul.f32 %v148, %v163
    %v178 = vmul.f32 %v153, %v163
    %v179 = vmul.f32 %v158, %v163
    %181 = vset.pattern.permute.xlu0 0
    %182 = vperm.xlu0 %181, %v39
    %v183 = vpop.permute.xlu0 %182
    %186 = vset.pattern.permute.xlu0 0
    %187 = vperm.xlu0 %186, %v40
    %v188 = vpop.permute.xlu0 %187
    %191 = vset.pattern.permute.xlu0 0
    %192 = vperm.xlu0 %191, %v41
    %v193 = vpop.permute.xlu0 %192
    %196 = vset.pattern.permute.xlu0 0
    %197 = vperm.xlu0 %196, %v42
    %v198 = vpop.permute.xlu0 %197
    %201 = vset.pattern.permute.xlu0 0
    %202 = vperm.xlu0 %201, %v43
    %v203 = vpop.permute.xlu0 %202
    %206 = vset.pattern.permute.xlu0 0
    %207 = vperm.xlu0 %206, %v44
    %v208 = vpop.permute.xlu0 %207
    %211 = vset.pattern.permute.xlu0 0
    %212 = vperm.xlu0 %211, %v45
    %v213 = vpop.permute.xlu0 %212
    %216 = vset.pattern.permute.xlu0 0
    %217 = vperm.xlu0 %216, %v46
    %v218 = vpop.permute.xlu0 %217
    %221 = vset.pattern.permute.xlu0 0
    %222 = vperm.xlu0 %221, %v47
    %v223 = vpop.permute.xlu0 %222
    %226 = vset.pattern.permute.xlu0 0
    %227 = vperm.xlu0 %226, %v48
    %v228 = vpop.permute.xlu0 %227
    %231 = vset.pattern.permute.xlu0 0
    %232 = vperm.xlu0 %231, %v49
    %v233 = vpop.permute.xlu0 %232
    %236 = vset.pattern.permute.xlu0 0
    %237 = vperm.xlu0 %236, %v50
    %v238 = vpop.permute.xlu0 %237
    %241 = vset.pattern.permute.xlu0 0
    %242 = vperm.xlu0 %241, %v51
    %v243 = vpop.permute.xlu0 %242
    %246 = vset.pattern.permute.xlu0 0
    %247 = vperm.xlu0 %246, %v52
    %v248 = vpop.permute.xlu0 %247
    %251 = vset.pattern.permute.xlu0 0
    %252 = vperm.xlu0 %251, %v53
    %v253 = vpop.permute.xlu0 %252
    %256 = vset.pattern.permute.xlu0 0
    %257 = vperm.xlu0 %256, %v54
    %v258 = vpop.permute.xlu0 %257
    %v260 = vadd.f32 %v164, %v183
    %v261 = vadd.f32 %v165, %v188
    %v262 = vadd.f32 %v166, %v193
    %v263 = vadd.f32 %v167, %v198
    %v264 = vadd.f32 %v168, %v203
    %v265 = vadd.f32 %v169, %v208
    %v266 = vadd.f32 %v170, %v213
    %v267 = vadd.f32 %v171, %v218
    %v268 = vadd.f32 %v172, %v223
    %v269 = vadd.f32 %v173, %v228
    %v270 = vadd.f32 %v174, %v233
    %v271 = vadd.f32 %v175, %v238
    %v272 = vadd.f32 %v176, %v243
    %v273 = vadd.f32 %v177, %v248
    %v274 = vadd.f32 %v178, %v253
    %v275 = vadd.f32 %v179, %v258
    %v276 = vld [vmem:[%s3] sm:$0xff]
    %v277 = vld [vmem:[%s3 + $0x8] sm:$0xff]
    %v278 = vld [vmem:[%s3 + $0x10] sm:$0xff]
    %v279 = vld [vmem:[%s3 + $0x18] sm:$0xff]
    %v280 = vld [vmem:[%s3 + $0x20] sm:$0xff]
    %v281 = vld [vmem:[%s3 + $0x28] sm:$0xff]
    %v282 = vld [vmem:[%s3 + $0x30] sm:$0xff]
    %v283 = vld [vmem:[%s3 + $0x38] sm:$0xff]
    %v284 = vld [vmem:[%s3 + $0x40] sm:$0xff]
    %v285 = vld [vmem:[%s3 + $0x48] sm:$0xff]
    %v286 = vld [vmem:[%s3 + $0x50] sm:$0xff]
    %v287 = vld [vmem:[%s3 + $0x58] sm:$0xff]
    %v288 = vld [vmem:[%s3 + $0x60] sm:$0xff]
    %v289 = vld [vmem:[%s3 + $0x68] sm:$0xff]
    %v290 = vld [vmem:[%s3 + $0x70] sm:$0xff]
    %v291 = vld [vmem:[%s3 + $0x78] sm:$0xff]
    %292 = vmatprep.subr.mxu0 0.0
    %293 = vmatpush1.msra.mxu0 %v61
    %294 = vmatprep.subr.mxu0 0.0
    %295 = vmatpush1.msra.mxu0 %v62
    %296 = vmatprep.subr.mxu0 0.0
    %297 = vmatpush1.msra.mxu0 %v63
    %298 = vmatprep.subr.mxu0 0.0
    %299 = vmatpush1.msra.mxu0 %v64
    %300 = vmatprep.subr.mxu0 0.0
    %301 = vmatpush1.msra.mxu0 %v65
    %302 = vmatprep.subr.mxu0 0.0
    %303 = vmatpush1.msra.mxu0 %v66
    %304 = vmatprep.subr.mxu0 0.0
    %305 = vmatpush1.msra.mxu0 %v67
    %306 = vmatprep.subr.mxu0 0.0
    %307 = vmatpush1.msra.mxu0 %v68
    %308 = vmatprep.subr.mxu0 0.0
    %309 = vmatpush1.msra.mxu0 %v69
    %310 = vmatprep.subr.mxu0 0.0
    %311 = vmatpush1.msra.mxu0 %v70
    %312 = vmatprep.subr.mxu0 0.0
    %313 = vmatpush1.msra.mxu0 %v71
    %314 = vmatprep.subr.mxu0 0.0
    %315 = vmatpush1.msra.mxu0 %v72
    %316 = vmatprep.subr.mxu0 0.0
    %317 = vmatpush1.msra.mxu0 %v73
    %318 = vmatprep.subr.mxu0 0.0
    %319 = vmatpush1.msra.mxu0 %v74
    %320 = vmatprep.subr.mxu0 0.0
    %321 = vmatpush1.msra.mxu0 %v75
    %322 = vmatprep.subr.mxu0 0.0
    %323 = vmatpush1.msra.mxu0 %v76
    %324 = vmatprep.subr.mxu0 0.0
    %325 = vmatpush1.msra.mxu0 0.0
    %326 = vmatprep.subr.mxu0 0.0
    %327 = vmatpush1.msra.mxu0 0.0
    %328 = vmatprep.subr.mxu0 0.0
    %329 = vmatpush1.msra.mxu0 0.0
    %330 = vmatprep.subr.mxu0 0.0
    %331 = vmatpush1.msra.mxu0 0.0
    %332 = vmatprep.subr.mxu0 0.0
    %333 = vmatpush1.msra.mxu0 0.0
    %334 = vmatprep.subr.mxu0 0.0
    %335 = vmatpush1.msra.mxu0 0.0
    %336 = vmatprep.subr.mxu0 0.0
    %337 = vmatpush1.msra.mxu0 0.0
    %338 = vmatprep.subr.mxu0 0.0
    %339 = vmatpush1.msra.mxu0 0.0
    %340 = vmatprep.subr.mxu0 0.0
    %341 = vmatpush1.msra.mxu0 0.0
    %342 = vmatprep.subr.mxu0 0.0
    %343 = vmatpush1.msra.mxu0 0.0
    %344 = vmatprep.subr.mxu0 0.0
    %345 = vmatpush1.msra.mxu0 0.0
    %346 = vmatprep.subr.mxu0 0.0
    %347 = vmatpush1.msra.mxu0 0.0
    %348 = vmatprep.subr.mxu0 0.0
    %349 = vmatpush1.msra.mxu0 0.0
    %350 = vmatprep.subr.mxu0 0.0
    %351 = vmatpush1.msra.mxu0 0.0
    %352 = vmatprep.subr.mxu0 0.0
    %353 = vmatpush1.msra.mxu0 0.0
    %354 = vmatprep.subr.mxu0 0.0
    %355 = vmatpush1.msra.mxu0 0.0
    %356 = vmatprep.mubr.f32.mxu0 0.0
    %357 = vmatmul.mubr.f32.gmra.mrb[0].mxu0 %v276
    %v358 = vpop.f32.mrb[0].mxu0
    %v359 = vadd.f32 %v260, %v358
    %v360 = vpop.f32.mrb[0].mxu0
    %361 = vmatprep.mubr.f32.mxu0 0.0
    %362 = vmatmul.mubr.f32.gmra.mrb[0].mxu0 %v277
    %v363 = vpop.f32.mrb[0].mxu0
    %v364 = vadd.f32 %v261, %v363
    %v365 = vpop.f32.mrb[0].mxu0
    %366 = vmatprep.mubr.f32.mxu0 0.0
    %367 = vmatmul.mubr.f32.gmra.mrb[0].mxu0 %v278
    %v368 = vpop.f32.mrb[0].mxu0
    %v369 = vadd.f32 %v262, %v368
    %v370 = vpop.f32.mrb[0].mxu0
    %371 = vmatprep.mubr.f32.mxu0 0.0
    %372 = vmatmul.mubr.f32.gmra.mrb[0].mxu0 %v279
    %v373 = vpop.f32.mrb[0].mxu0
    %v374 = vadd.f32 %v263, %v373
    %v375 = vpop.f32.mrb[0].mxu0
    %376 = vmatprep.mubr.f32.mxu0 0.0
    %377 = vmatmul.mubr.f32.gmra.mrb[0].mxu0 %v280
    %v378 = vpop.f32.mrb[0].mxu0
    %v379 = vadd.f32 %v264, %v378
    %v380 = vpop.f32.mrb[0].mxu0
    %381 = vmatprep.mubr.f32.mxu0 0.0
    %382 = vmatmul.mubr.f32.gmra.mrb[0].mxu0 %v281
    %v383 = vpop.f32.mrb[0].mxu0
    %v384 = vadd.f32 %v265, %v383
    %v385 = vpop.f32.mrb[0].mxu0
    %386 = vmatprep.mubr.f32.mxu0 0.0
    %387 = vmatmul.mubr.f32.gmra.mrb[0].mxu0 %v282
    %v388 = vpop.f32.mrb[0].mxu0
    %v389 = vadd.f32 %v266, %v388
    %v390 = vpop.f32.mrb[0].mxu0
    %391 = vmatprep.mubr.f32.mxu0 0.0
    %392 = vmatmul.mubr.f32.gmra.mrb[0].mxu0 %v283
    %v393 = vpop.f32.mrb[0].mxu0
    %v394 = vadd.f32 %v267, %v393
    %v395 = vpop.f32.mrb[0].mxu0
    %396 = vmatprep.mubr.f32.mxu0 0.0
    %397 = vmatmul.mubr.f32.gmra.mrb[0].mxu0 %v284
    %v398 = vpop.f32.mrb[0].mxu0
    %v399 = vadd.f32 %v268, %v398
    %v400 = vpop.f32.mrb[0].mxu0
    %401 = vmatprep.mubr.f32.mxu0 0.0
    %402 = vmatmul.mubr.f32.gmra.mrb[0].mxu0 %v285
    %v403 = vpop.f32.mrb[0].mxu0
    %v404 = vadd.f32 %v269, %v403
    %v405 = vpop.f32.mrb[0].mxu0
    %406 = vmatprep.mubr.f32.mxu0 0.0
    %407 = vmatmul.mubr.f32.gmra.mrb[0].mxu0 %v286
    %v408 = vpop.f32.mrb[0].mxu0
    %v409 = vadd.f32 %v270, %v408
    %v410 = vpop.f32.mrb[0].mxu0
    %411 = vmatprep.mubr.f32.mxu0 0.0
    %412 = vmatmul.mubr.f32.gmra.mrb[0].mxu0 %v287
    %v413 = vpop.f32.mrb[0].mxu0
    %v414 = vadd.f32 %v271, %v413
    %v415 = vpop.f32.mrb[0].mxu0
    %416 = vmatprep.mubr.f32.mxu0 0.0
    %417 = vmatmul.mubr.f32.gmra.mrb[0].mxu0 %v288
    %v418 = vpop.f32.mrb[0].mxu0
    %v419 = vadd.f32 %v272, %v418
    %v420 = vpop.f32.mrb[0].mxu0
    %421 = vmatprep.mubr.f32.mxu0 0.0
    %422 = vmatmul.mubr.f32.gmra.mrb[0].mxu0 %v289
    %v423 = vpop.f32.mrb[0].mxu0
    %v424 = vadd.f32 %v273, %v423
    %v425 = vpop.f32.mrb[0].mxu0
    %426 = vmatprep.mubr.f32.mxu0 0.0
    %427 = vmatmul.mubr.f32.gmra.mrb[0].mxu0 %v290
    %v428 = vpop.f32.mrb[0].mxu0
    %v429 = vadd.f32 %v274, %v428
    %v430 = vpop.f32.mrb[0].mxu0
    %431 = vmatprep.mubr.f32.mxu0 0.0
    %432 = vmatmul.mubr.f32.gmra.mrb[0].mxu0 %v291
    %v433 = vpop.f32.mrb[0].mxu0
    %v434 = vadd.f32 %v275, %v433
    %v435 = vpop.f32.mrb[0].mxu0
    %436 = vdwg.mxu0
    %v437 = vmax.f32 %v359, 0.0
    %v438 = vmax.f32 %v364, 0.0
    %v439 = vmax.f32 %v369, 0.0
    %v440 = vmax.f32 %v374, 0.0
    %v441 = vmax.f32 %v379, 0.0
    %v442 = vmax.f32 %v384, 0.0
    %v443 = vmax.f32 %v389, 0.0
    %v444 = vmax.f32 %v394, 0.0
    %v445 = vmax.f32 %v399, 0.0
    %v446 = vmax.f32 %v404, 0.0
    %v447 = vmax.f32 %v409, 0.0
    %v448 = vmax.f32 %v414, 0.0
    %v449 = vmax.f32 %v419, 0.0
    %v450 = vmax.f32 %v424, 0.0
    %v451 = vmax.f32 %v429, 0.0
    %v452 = vmax.f32 %v434, 0.0
    %v453 = vlaneseq
    %v454 = vshrl.u32 %v453, 7
    %v455 = vsub.s32 1, %v454
    %v456 = vrot.slane %v79, %v455
    %v457 = vmul.f32 %v83, %v456
    %v458 = vmul.f32 %v88, %v456
    %v459 = vmul.f32 %v93, %v456
    %v460 = vmul.f32 %v98, %v456
    %v461 = vmul.f32 %v103, %v456
    %v462 = vmul.f32 %v108, %v456
    %v463 = vmul.f32 %v113, %v456
    %v464 = vmul.f32 %v118, %v456
    %v465 = vmul.f32 %v123, %v456
    %v466 = vmul.f32 %v128, %v456
    %v467 = vmul.f32 %v133, %v456
    %v468 = vmul.f32 %v138, %v456
    %v469 = vmul.f32 %v143, %v456
    %v470 = vmul.f32 %v148, %v456
    %v471 = vmul.f32 %v153, %v456
    %v472 = vmul.f32 %v158, %v456
    %v473 = vadd.f32 %v457, %v183
    %v474 = vadd.f32 %v458, %v188
    %v475 = vadd.f32 %v459, %v193
    %v476 = vadd.f32 %v460, %v198
    %v477 = vadd.f32 %v461, %v203
    %v478 = vadd.f32 %v462, %v208
    %v479 = vadd.f32 %v463, %v213
    %v480 = vadd.f32 %v464, %v218
    %v481 = vadd.f32 %v465, %v223
    %v482 = vadd.f32 %v466, %v228
    %v483 = vadd.f32 %v467, %v233
    %v484 = vadd.f32 %v468, %v238
    %v485 = vadd.f32 %v469, %v243
    %v486 = vadd.f32 %v470, %v248
    %v487 = vadd.f32 %v471, %v253
    %v488 = vadd.f32 %v472, %v258
    %489 = vmatprep.subr.mxu0 0.0
    %490 = vmatpush1.msra.mxu0 %v437
    %491 = vmatprep.subr.mxu0 0.0
    %492 = vmatpush1.msra.mxu0 %v438
    %493 = vmatprep.subr.mxu0 0.0
    %494 = vmatpush1.msra.mxu0 %v439
    %495 = vmatprep.subr.mxu0 0.0
    %496 = vmatpush1.msra.mxu0 %v440
    %497 = vmatprep.subr.mxu0 0.0
    %498 = vmatpush1.msra.mxu0 %v441
    %499 = vmatprep.subr.mxu0 0.0
    %500 = vmatpush1.msra.mxu0 %v442
    %501 = vmatprep.subr.mxu0 0.0
    %502 = vmatpush1.msra.mxu0 %v443
    %503 = vmatprep.subr.mxu0 0.0
    %504 = vmatpush1.msra.mxu0 %v444
    %505 = vmatprep.subr.mxu0 0.0
    %506 = vmatpush1.msra.mxu0 %v445
    %507 = vmatprep.subr.mxu0 0.0
    %508 = vmatpush1.msra.mxu0 %v446
    %509 = vmatprep.subr.mxu0 0.0
    %510 = vmatpush1.msra.mxu0 %v447
    %511 = vmatprep.subr.mxu0 0.0
    %512 = vmatpush1.msra.mxu0 %v448
    %513 = vmatprep.subr.mxu0 0.0
    %514 = vmatpush1.msra.mxu0 %v449
    %515 = vmatprep.subr.mxu0 0.0
    %516 = vmatpush1.msra.mxu0 %v450
    %517 = vmatprep.subr.mxu0 0.0
    %518 = vmatpush1.msra.mxu0 %v451
    %519 = vmatprep.subr.mxu0 0.0
    %520 = vmatpush1.msra.mxu0 %v452
    %521 = vmatprep.subr.mxu0 0.0
    %522 = vmatpush1.msra.mxu0 0.0
    %523 = vmatprep.subr.mxu0 0.0
    %524 = vmatpush1.msra.mxu0 0.0
    %525 = vmatprep.subr.mxu0 0.0
    %526 = vmatpush1.msra.mxu0 0.0
    %527 = vmatprep.subr.mxu0 0.0
    %528 = vmatpush1.msra.mxu0 0.0
    %529 = vmatprep.subr.mxu0 0.0
    %530 = vmatpush1.msra.mxu0 0.0
    %531 = vmatprep.subr.mxu0 0.0
    %532 = vmatpush1.msra.mxu0 0.0
    %533 = vmatprep.subr.mxu0 0.0
    %534 = vmatpush1.msra.mxu0 0.0
    %535 = vmatprep.subr.mxu0 0.0
    %536 = vmatpush1.msra.mxu0 0.0
    %537 = vmatprep.subr.mxu0 0.0
    %538 = vmatpush1.msra.mxu0 0.0
    %539 = vmatprep.subr.mxu0 0.0
    %540 = vmatpush1.msra.mxu0 0.0
    %541 = vmatprep.subr.mxu0 0.0
    %542 = vmatpush1.msra.mxu0 0.0
    %543 = vmatprep.subr.mxu0 0.0
    %544 = vmatpush1.msra.mxu0 0.0
    %545 = vmatprep.subr.mxu0 0.0
    %546 = vmatpush1.msra.mxu0 0.0
    %547 = vmatprep.subr.mxu0 0.0
    %548 = vmatpush1.msra.mxu0 0.0
    %549 = vmatprep.subr.mxu0 0.0
    %550 = vmatpush1.msra.mxu0 0.0
    %551 = vmatprep.subr.mxu0 0.0
    %552 = vmatpush1.msra.mxu0 0.0
    %553 = vmatprep.mubr.f32.mxu0 0.0
    %554 = vmatmul.mubr.f32.gmra.mrb[0].mxu0 %v276
    %v555 = vpop.f32.mrb[0].mxu0
    %v556 = vadd.f32 %v473, %v555
    %v557 = vpop.f32.mrb[0].mxu0
    %558 = vmatprep.mubr.f32.mxu0 0.0
    %559 = vmatmul.mubr.f32.gmra.mrb[0].mxu0 %v277
    %v560 = vpop.f32.mrb[0].mxu0
    %v561 = vadd.f32 %v474, %v560
    %v562 = vpop.f32.mrb[0].mxu0
    %563 = vmatprep.mubr.f32.mxu0 0.0
    %564 = vmatmul.mubr.f32.gmra.mrb[0].mxu0 %v278
    %v565 = vpop.f32.mrb[0].mxu0
    %v566 = vadd.f32 %v475, %v565
    %v567 = vpop.f32.mrb[0].mxu0
    %568 = vmatprep.mubr.f32.mxu0 0.0
    %569 = vmatmul.mubr.f32.gmra.mrb[0].mxu0 %v279
    %v570 = vpop.f32.mrb[0].mxu0
    %v571 = vadd.f32 %v476, %v570
    %v572 = vpop.f32.mrb[0].mxu0
    %573 = vmatprep.mubr.f32.mxu0 0.0
    %574 = vmatmul.mubr.f32.gmra.mrb[0].mxu0 %v280
    %v575 = vpop.f32.mrb[0].mxu0
    %v576 = vadd.f32 %v477, %v575
    %v577 = vpop.f32.mrb[0].mxu0
    %578 = vmatprep.mubr.f32.mxu0 0.0
    %579 = vmatmul.mubr.f32.gmra.mrb[0].mxu0 %v281
    %v580 = vpop.f32.mrb[0].mxu0
    %v581 = vadd.f32 %v478, %v580
    %v582 = vpop.f32.mrb[0].mxu0
    %583 = vmatprep.mubr.f32.mxu0 0.0
    %584 = vmatmul.mubr.f32.gmra.mrb[0].mxu0 %v282
    %v585 = vpop.f32.mrb[0].mxu0
    %v586 = vadd.f32 %v479, %v585
    %v587 = vpop.f32.mrb[0].mxu0
    %588 = vmatprep.mubr.f32.mxu0 0.0
    %589 = vmatmul.mubr.f32.gmra.mrb[0].mxu0 %v283
    %v590 = vpop.f32.mrb[0].mxu0
    %v591 = vadd.f32 %v480, %v590
    %v592 = vpop.f32.mrb[0].mxu0
    %593 = vmatprep.mubr.f32.mxu0 0.0
    %594 = vmatmul.mubr.f32.gmra.mrb[0].mxu0 %v284
    %v595 = vpop.f32.mrb[0].mxu0
    %v596 = vadd.f32 %v481, %v595
    %v597 = vpop.f32.mrb[0].mxu0
    %598 = vmatprep.mubr.f32.mxu0 0.0
    %599 = vmatmul.mubr.f32.gmra.mrb[0].mxu0 %v285
    %v600 = vpop.f32.mrb[0].mxu0
    %v601 = vadd.f32 %v482, %v600
    %v602 = vpop.f32.mrb[0].mxu0
    %603 = vmatprep.mubr.f32.mxu0 0.0
    %604 = vmatmul.mubr.f32.gmra.mrb[0].mxu0 %v286
    %v605 = vpop.f32.mrb[0].mxu0
    %v606 = vadd.f32 %v483, %v605
    %v607 = vpop.f32.mrb[0].mxu0
    %608 = vmatprep.mubr.f32.mxu0 0.0
    %609 = vmatmul.mubr.f32.gmra.mrb[0].mxu0 %v287
    %v610 = vpop.f32.mrb[0].mxu0
    %v611 = vadd.f32 %v484, %v610
    %v612 = vpop.f32.mrb[0].mxu0
    %613 = vmatprep.mubr.f32.mxu0 0.0
    %614 = vmatmul.mubr.f32.gmra.mrb[0].mxu0 %v288
    %v615 = vpop.f32.mrb[0].mxu0
    %v616 = vadd.f32 %v485, %v615
    %v617 = vpop.f32.mrb[0].mxu0
    %618 = vmatprep.mubr.f32.mxu0 0.0
    %619 = vmatmul.mubr.f32.gmra.mrb[0].mxu0 %v289
    %v620 = vpop.f32.mrb[0].mxu0
    %v621 = vadd.f32 %v486, %v620
    %v622 = vpop.f32.mrb[0].mxu0
    %623 = vmatprep.mubr.f32.mxu0 0.0
    %624 = vmatmul.mubr.f32.gmra.mrb[0].mxu0 %v290
    %v625 = vpop.f32.mrb[0].mxu0
    %v626 = vadd.f32 %v487, %v625
    %v627 = vpop.f32.mrb[0].mxu0
    %628 = vmatprep.mubr.f32.mxu0 0.0
    %629 = vmatmul.mubr.f32.gmra.mrb[0].mxu0 %v291
    %v630 = vpop.f32.mrb[0].mxu0
    %v631 = vadd.f32 %v488, %v630
    %v632 = vpop.f32.mrb[0].mxu0
    %633 = vdwg.mxu0
    %v634 = vmax.f32 %v556, 0.0
    %v635 = vmax.f32 %v561, 0.0
    %v636 = vmax.f32 %v566, 0.0
    %v637 = vmax.f32 %v571, 0.0
    %v638 = vmax.f32 %v576, 0.0
    %v639 = vmax.f32 %v581, 0.0
    %v640 = vmax.f32 %v586, 0.0
    %v641 = vmax.f32 %v591, 0.0
    %v642 = vmax.f32 %v596, 0.0
    %v643 = vmax.f32 %v601, 0.0
    %v644 = vmax.f32 %v606, 0.0
    %v645 = vmax.f32 %v611, 0.0
    %v646 = vmax.f32 %v616, 0.0
    %v647 = vmax.f32 %v621, 0.0
    %v648 = vmax.f32 %v626, 0.0
    %v649 = vmax.f32 %v631, 0.0
    %v650 = vlaneseq
    %v651 = vshrl.u32 %v650, 7
    %v652 = vsub.s32 2, %v651
    %v653 = vrot.slane %v79, %v652
    %v654 = vmul.f32 %v83, %v653
    %v655 = vmul.f32 %v88, %v653
    %v656 = vmul.f32 %v93, %v653
    %v657 = vmul.f32 %v98, %v653
    %v658 = vmul.f32 %v103, %v653
    %v659 = vmul.f32 %v108, %v653
    %v660 = vmul.f32 %v113, %v653
    %v661 = vmul.f32 %v118, %v653
    %v662 = vmul.f32 %v123, %v653
    %v663 = vmul.f32 %v128, %v653
    %v664 = vmul.f32 %v133, %v653
    %v665 = vmul.f32 %v138, %v653
    %v666 = vmul.f32 %v143, %v653
    %v667 = vmul.f32 %v148, %v653
    %v668 = vmul.f32 %v153, %v653
    %v669 = vmul.f32 %v158, %v653
    %v670 = vadd.f32 %v654, %v183
    %v671 = vadd.f32 %v655, %v188
    %v672 = vadd.f32 %v656, %v193
    %v673 = vadd.f32 %v657, %v198
    %v674 = vadd.f32 %v658, %v203
    %v675 = vadd.f32 %v659, %v208
    %v676 = vadd.f32 %v660, %v213
    %v677 = vadd.f32 %v661, %v218
    %v678 = vadd.f32 %v662, %v223
    %v679 = vadd.f32 %v663, %v228
    %v680 = vadd.f32 %v664, %v233
    %v681 = vadd.f32 %v665, %v238
    %v682 = vadd.f32 %v666, %v243
    %v683 = vadd.f32 %v667, %v248
    %v684 = vadd.f32 %v668, %v253
    %v685 = vadd.f32 %v669, %v258
    %686 = vmatprep.subr.mxu0 0.0
    %687 = vmatpush1.msra.mxu0 %v634
    %688 = vmatprep.subr.mxu0 0.0
    %689 = vmatpush1.msra.mxu0 %v635
    %690 = vmatprep.subr.mxu0 0.0
    %691 = vmatpush1.msra.mxu0 %v636
    %692 = vmatprep.subr.mxu0 0.0
    %693 = vmatpush1.msra.mxu0 %v637
    %694 = vmatprep.subr.mxu0 0.0
    %695 = vmatpush1.msra.mxu0 %v638
    %696 = vmatprep.subr.mxu0 0.0
    %697 = vmatpush1.msra.mxu0 %v639
    %698 = vmatprep.subr.mxu0 0.0
    %699 = vmatpush1.msra.mxu0 %v640
    %700 = vmatprep.subr.mxu0 0.0
    %701 = vmatpush1.msra.mxu0 %v641
    %702 = vmatprep.subr.mxu0 0.0
    %703 = vmatpush1.msra.mxu0 %v642
    %704 = vmatprep.subr.mxu0 0.0
    %705 = vmatpush1.msra.mxu0 %v643
    %706 = vmatprep.subr.mxu0 0.0
    %707 = vmatpush1.msra.mxu0 %v644
    %708 = vmatprep.subr.mxu0 0.0
    %709 = vmatpush1.msra.mxu0 %v645
    %710 = vmatprep.subr.mxu0 0.0
    %711 = vmatpush1.msra.mxu0 %v646
    %712 = vmatprep.subr.mxu0 0.0
    %713 = vmatpush1.msra.mxu0 %v647
    %714 = vmatprep.subr.mxu0 0.0
    %715 = vmatpush1.msra.mxu0 %v648
    %716 = vmatprep.subr.mxu0 0.0
    %717 = vmatpush1.msra.mxu0 %v649
    %718 = vmatprep.subr.mxu0 0.0
    %719 = vmatpush1.msra.mxu0 0.0
    %720 = vmatprep.subr.mxu0 0.0
    %721 = vmatpush1.msra.mxu0 0.0
    %722 = vmatprep.subr.mxu0 0.0
    %723 = vmatpush1.msra.mxu0 0.0
    %724 = vmatprep.subr.mxu0 0.0
    %725 = vmatpush1.msra.mxu0 0.0
    %726 = vmatprep.subr.mxu0 0.0
    %727 = vmatpush1.msra.mxu0 0.0
    %728 = vmatprep.subr.mxu0 0.0
    %729 = vmatpush1.msra.mxu0 0.0
    %730 = vmatprep.subr.mxu0 0.0
    %731 = vmatpush1.msra.mxu0 0.0
    %732 = vmatprep.subr.mxu0 0.0
    %733 = vmatpush1.msra.mxu0 0.0
    %734 = vmatprep.subr.mxu0 0.0
    %735 = vmatpush1.msra.mxu0 0.0
    %736 = vmatprep.subr.mxu0 0.0
    %737 = vmatpush1.msra.mxu0 0.0
    %738 = vmatprep.subr.mxu0 0.0
    %739 = vmatpush1.msra.mxu0 0.0
    %740 = vmatprep.subr.mxu0 0.0
    %741 = vmatpush1.msra.mxu0 0.0
    %742 = vmatprep.subr.mxu0 0.0
    %743 = vmatpush1.msra.mxu0 0.0
    %744 = vmatprep.subr.mxu0 0.0
    %745 = vmatpush1.msra.mxu0 0.0
    %746 = vmatprep.subr.mxu0 0.0
    %747 = vmatpush1.msra.mxu0 0.0
    %748 = vmatprep.subr.mxu0 0.0
    %749 = vmatpush1.msra.mxu0 0.0
    %750 = vmatprep.mubr.f32.mxu0 0.0
    %751 = vmatmul.mubr.f32.gmra.mrb[0].mxu0 %v276
    %v752 = vpop.f32.mrb[0].mxu0
    %v753 = vadd.f32 %v670, %v752
    %v754 = vpop.f32.mrb[0].mxu0
    %755 = vmatprep.mubr.f32.mxu0 0.0
    %756 = vmatmul.mubr.f32.gmra.mrb[0].mxu0 %v277
    %v757 = vpop.f32.mrb[0].mxu0
    %v758 = vadd.f32 %v671, %v757
    %v759 = vpop.f32.mrb[0].mxu0
    %760 = vmatprep.mubr.f32.mxu0 0.0
    %761 = vmatmul.mubr.f32.gmra.mrb[0].mxu0 %v278
    %v762 = vpop.f32.mrb[0].mxu0
    %v763 = vadd.f32 %v672, %v762
    %v764 = vpop.f32.mrb[0].mxu0
    %765 = vmatprep.mubr.f32.mxu0 0.0
    %766 = vmatmul.mubr.f32.gmra.mrb[0].mxu0 %v279
    %v767 = vpop.f32.mrb[0].mxu0
    %v768 = vadd.f32 %v673, %v767
    %v769 = vpop.f32.mrb[0].mxu0
    %770 = vmatprep.mubr.f32.mxu0 0.0
    %771 = vmatmul.mubr.f32.gmra.mrb[0].mxu0 %v280
    %v772 = vpop.f32.mrb[0].mxu0
    %v773 = vadd.f32 %v674, %v772
    %v774 = vpop.f32.mrb[0].mxu0
    %775 = vmatprep.mubr.f32.mxu0 0.0
    %776 = vmatmul.mubr.f32.gmra.mrb[0].mxu0 %v281
    %v777 = vpop.f32.mrb[0].mxu0
    %v778 = vadd.f32 %v675, %v777
    %v779 = vpop.f32.mrb[0].mxu0
    %780 = vmatprep.mubr.f32.mxu0 0.0
    %781 = vmatmul.mubr.f32.gmra.mrb[0].mxu0 %v282
    %v782 = vpop.f32.mrb[0].mxu0
    %v783 = vadd.f32 %v676, %v782
    %v784 = vpop.f32.mrb[0].mxu0
    %785 = vmatprep.mubr.f32.mxu0 0.0
    %786 = vmatmul.mubr.f32.gmra.mrb[0].mxu0 %v283
    %v787 = vpop.f32.mrb[0].mxu0
    %v788 = vadd.f32 %v677, %v787
    %v789 = vpop.f32.mrb[0].mxu0
    %790 = vmatprep.mubr.f32.mxu0 0.0
    %791 = vmatmul.mubr.f32.gmra.mrb[0].mxu0 %v284
    %v792 = vpop.f32.mrb[0].mxu0
    %v793 = vadd.f32 %v678, %v792
    %v794 = vpop.f32.mrb[0].mxu0
    %795 = vmatprep.mubr.f32.mxu0 0.0
    %796 = vmatmul.mubr.f32.gmra.mrb[0].mxu0 %v285
    %v797 = vpop.f32.mrb[0].mxu0
    %v798 = vadd.f32 %v679, %v797
    %v799 = vpop.f32.mrb[0].mxu0
    %800 = vmatprep.mubr.f32.mxu0 0.0
    %801 = vmatmul.mubr.f32.gmra.mrb[0].mxu0 %v286
    %v802 = vpop.f32.mrb[0].mxu0
    %v803 = vadd.f32 %v680, %v802
    %v804 = vpop.f32.mrb[0].mxu0
    %805 = vmatprep.mubr.f32.mxu0 0.0
    %806 = vmatmul.mubr.f32.gmra.mrb[0].mxu0 %v287
    %v807 = vpop.f32.mrb[0].mxu0
    %v808 = vadd.f32 %v681, %v807
    %v809 = vpop.f32.mrb[0].mxu0
    %810 = vmatprep.mubr.f32.mxu0 0.0
    %811 = vmatmul.mubr.f32.gmra.mrb[0].mxu0 %v288
    %v812 = vpop.f32.mrb[0].mxu0
    %v813 = vadd.f32 %v682, %v812
    %v814 = vpop.f32.mrb[0].mxu0
    %815 = vmatprep.mubr.f32.mxu0 0.0
    %816 = vmatmul.mubr.f32.gmra.mrb[0].mxu0 %v289
    %v817 = vpop.f32.mrb[0].mxu0
    %v818 = vadd.f32 %v683, %v817
    %v819 = vpop.f32.mrb[0].mxu0
    %820 = vmatprep.mubr.f32.mxu0 0.0
    %821 = vmatmul.mubr.f32.gmra.mrb[0].mxu0 %v290
    %v822 = vpop.f32.mrb[0].mxu0
    %v823 = vadd.f32 %v684, %v822
    %v824 = vpop.f32.mrb[0].mxu0
    %825 = vmatprep.mubr.f32.mxu0 0.0
    %826 = vmatmul.mubr.f32.gmra.mrb[0].mxu0 %v291
    %v827 = vpop.f32.mrb[0].mxu0
    %v828 = vadd.f32 %v685, %v827
    %v829 = vpop.f32.mrb[0].mxu0
    %830 = vdwg.mxu0
    %v831 = vmax.f32 %v753, 0.0
    %v832 = vmax.f32 %v758, 0.0
    %v833 = vmax.f32 %v763, 0.0
    %v834 = vmax.f32 %v768, 0.0
    %v835 = vmax.f32 %v773, 0.0
    %v836 = vmax.f32 %v778, 0.0
    %v837 = vmax.f32 %v783, 0.0
    %v838 = vmax.f32 %v788, 0.0
    %v839 = vmax.f32 %v793, 0.0
    %v840 = vmax.f32 %v798, 0.0
    %v841 = vmax.f32 %v803, 0.0
    %v842 = vmax.f32 %v808, 0.0
    %v843 = vmax.f32 %v813, 0.0
    %v844 = vmax.f32 %v818, 0.0
    %v845 = vmax.f32 %v823, 0.0
    %v846 = vmax.f32 %v828, 0.0
    %v847 = vlaneseq
    %v848 = vshrl.u32 %v847, 7
    %v849 = vsub.s32 3, %v848
    %v850 = vrot.slane %v79, %v849
    %v851 = vmul.f32 %v83, %v850
    %v852 = vmul.f32 %v88, %v850
    %v853 = vmul.f32 %v93, %v850
    %v854 = vmul.f32 %v98, %v850
    %v855 = vmul.f32 %v103, %v850
    %v856 = vmul.f32 %v108, %v850
    %v857 = vmul.f32 %v113, %v850
    %v858 = vmul.f32 %v118, %v850
    %v859 = vmul.f32 %v123, %v850
    %v860 = vmul.f32 %v128, %v850
    %v861 = vmul.f32 %v133, %v850
    %v862 = vmul.f32 %v138, %v850
    %v863 = vmul.f32 %v143, %v850
    %v864 = vmul.f32 %v148, %v850
    %v865 = vmul.f32 %v153, %v850
    %v866 = vmul.f32 %v158, %v850
    %v867 = vadd.f32 %v851, %v183
    %v868 = vadd.f32 %v852, %v188
    %v869 = vadd.f32 %v853, %v193
    %v870 = vadd.f32 %v854, %v198
    %v871 = vadd.f32 %v855, %v203
    %v872 = vadd.f32 %v856, %v208
    %v873 = vadd.f32 %v857, %v213
    %v874 = vadd.f32 %v858, %v218
    %v875 = vadd.f32 %v859, %v223
    %v876 = vadd.f32 %v860, %v228
    %v877 = vadd.f32 %v861, %v233
    %v878 = vadd.f32 %v862, %v238
    %v879 = vadd.f32 %v863, %v243
    %v880 = vadd.f32 %v864, %v248
    %v881 = vadd.f32 %v865, %v253
    %v882 = vadd.f32 %v866, %v258
    %883 = vmatprep.subr.mxu0 0.0
    %884 = vmatpush1.msra.mxu0 %v831
    %885 = vmatprep.subr.mxu0 0.0
    %886 = vmatpush1.msra.mxu0 %v832
    %887 = vmatprep.subr.mxu0 0.0
    %888 = vmatpush1.msra.mxu0 %v833
    %889 = vmatprep.subr.mxu0 0.0
    %890 = vmatpush1.msra.mxu0 %v834
    %891 = vmatprep.subr.mxu0 0.0
    %892 = vmatpush1.msra.mxu0 %v835
    %893 = vmatprep.subr.mxu0 0.0
    %894 = vmatpush1.msra.mxu0 %v836
    %895 = vmatprep.subr.mxu0 0.0
    %896 = vmatpush1.msra.mxu0 %v837
    %897 = vmatprep.subr.mxu0 0.0
    %898 = vmatpush1.msra.mxu0 %v838
    %899 = vmatprep.subr.mxu0 0.0
    %900 = vmatpush1.msra.mxu0 %v839
    %901 = vmatprep.subr.mxu0 0.0
    %902 = vmatpush1.msra.mxu0 %v840
    %903 = vmatprep.subr.mxu0 0.0
    %904 = vmatpush1.msra.mxu0 %v841
    %905 = vmatprep.subr.mxu0 0.0
    %906 = vmatpush1.msra.mxu0 %v842
    %907 = vmatprep.subr.mxu0 0.0
    %908 = vmatpush1.msra.mxu0 %v843
    %909 = vmatprep.subr.mxu0 0.0
    %910 = vmatpush1.msra.mxu0 %v844
    %911 = vmatprep.subr.mxu0 0.0
    %912 = vmatpush1.msra.mxu0 %v845
    %913 = vmatprep.subr.mxu0 0.0
    %914 = vmatpush1.msra.mxu0 %v846
    %915 = vmatprep.subr.mxu0 0.0
    %916 = vmatpush1.msra.mxu0 0.0
    %917 = vmatprep.subr.mxu0 0.0
    %918 = vmatpush1.msra.mxu0 0.0
    %919 = vmatprep.subr.mxu0 0.0
    %920 = vmatpush1.msra.mxu0 0.0
    %921 = vmatprep.subr.mxu0 0.0
    %922 = vmatpush1.msra.mxu0 0.0
    %923 = vmatprep.subr.mxu0 0.0
    %924 = vmatpush1.msra.mxu0 0.0
    %925 = vmatprep.subr.mxu0 0.0
    %926 = vmatpush1.msra.mxu0 0.0
    %927 = vmatprep.subr.mxu0 0.0
    %928 = vmatpush1.msra.mxu0 0.0
    %929 = vmatprep.subr.mxu0 0.0
    %930 = vmatpush1.msra.mxu0 0.0
    %931 = vmatprep.subr.mxu0 0.0
    %932 = vmatpush1.msra.mxu0 0.0
    %933 = vmatprep.subr.mxu0 0.0
    %934 = vmatpush1.msra.mxu0 0.0
    %935 = vmatprep.subr.mxu0 0.0
    %936 = vmatpush1.msra.mxu0 0.0
    %937 = vmatprep.subr.mxu0 0.0
    %938 = vmatpush1.msra.mxu0 0.0
    %939 = vmatprep.subr.mxu0 0.0
    %940 = vmatpush1.msra.mxu0 0.0
    %941 = vmatprep.subr.mxu0 0.0
    %942 = vmatpush1.msra.mxu0 0.0
    %943 = vmatprep.subr.mxu0 0.0
    %944 = vmatpush1.msra.mxu0 0.0
    %945 = vmatprep.subr.mxu0 0.0
    %946 = vmatpush1.msra.mxu0 0.0
    %947 = vmatprep.mubr.f32.mxu0 0.0
    %948 = vmatmul.mubr.f32.gmra.mrb[0].mxu0 %v276
    %v949 = vpop.f32.mrb[0].mxu0
    %v950 = vadd.f32 %v867, %v949
    %v951 = vpop.f32.mrb[0].mxu0
    %952 = vmatprep.mubr.f32.mxu0 0.0
    %953 = vmatmul.mubr.f32.gmra.mrb[0].mxu0 %v277
    %v954 = vpop.f32.mrb[0].mxu0
    %v955 = vadd.f32 %v868, %v954
    %v956 = vpop.f32.mrb[0].mxu0
    %957 = vmatprep.mubr.f32.mxu0 0.0
    %958 = vmatmul.mubr.f32.gmra.mrb[0].mxu0 %v278
    %v959 = vpop.f32.mrb[0].mxu0
    %v960 = vadd.f32 %v869, %v959
    %v961 = vpop.f32.mrb[0].mxu0
    %962 = vmatprep.mubr.f32.mxu0 0.0
    %963 = vmatmul.mubr.f32.gmra.mrb[0].mxu0 %v279
    %v964 = vpop.f32.mrb[0].mxu0
    %v965 = vadd.f32 %v870, %v964
    %v966 = vpop.f32.mrb[0].mxu0
    %967 = vmatprep.mubr.f32.mxu0 0.0
    %968 = vmatmul.mubr.f32.gmra.mrb[0].mxu0 %v280
    %v969 = vpop.f32.mrb[0].mxu0
    %v970 = vadd.f32 %v871, %v969
    %v971 = vpop.f32.mrb[0].mxu0
    %972 = vmatprep.mubr.f32.mxu0 0.0
    %973 = vmatmul.mubr.f32.gmra.mrb[0].mxu0 %v281
    %v974 = vpop.f32.mrb[0].mxu0
    %v975 = vadd.f32 %v872, %v974
    %v976 = vpop.f32.mrb[0].mxu0
    %977 = vmatprep.mubr.f32.mxu0 0.0
    %978 = vmatmul.mubr.f32.gmra.mrb[0].mxu0 %v282
    %v979 = vpop.f32.mrb[0].mxu0
    %v980 = vadd.f32 %v873, %v979
    %v981 = vpop.f32.mrb[0].mxu0
    %982 = vmatprep.mubr.f32.mxu0 0.0
    %983 = vmatmul.mubr.f32.gmra.mrb[0].mxu0 %v283
    %v984 = vpop.f32.mrb[0].mxu0
    %v985 = vadd.f32 %v874, %v984
    %v986 = vpop.f32.mrb[0].mxu0
    %987 = vmatprep.mubr.f32.mxu0 0.0
    %988 = vmatmul.mubr.f32.gmra.mrb[0].mxu0 %v284
    %v989 = vpop.f32.mrb[0].mxu0
    %v990 = vadd.f32 %v875, %v989
    %v991 = vpop.f32.mrb[0].mxu0
    %992 = vmatprep.mubr.f32.mxu0 0.0
    %993 = vmatmul.mubr.f32.gmra.mrb[0].mxu0 %v285
    %v994 = vpop.f32.mrb[0].mxu0
    %v995 = vadd.f32 %v876, %v994
    %v996 = vpop.f32.mrb[0].mxu0
    %997 = vmatprep.mubr.f32.mxu0 0.0
    %998 = vmatmul.mubr.f32.gmra.mrb[0].mxu0 %v286
    %v999 = vpop.f32.mrb[0].mxu0
    %v1000 = vadd.f32 %v877, %v999
    %v1001 = vpop.f32.mrb[0].mxu0
    %1002 = vmatprep.mubr.f32.mxu0 0.0
    %1003 = vmatmul.mubr.f32.gmra.mrb[0].mxu0 %v287
    %v1004 = vpop.f32.mrb[0].mxu0
    %v1005 = vadd.f32 %v878, %v1004
    %v1006 = vpop.f32.mrb[0].mxu0
    %1007 = vmatprep.mubr.f32.mxu0 0.0
    %1008 = vmatmul.mubr.f32.gmra.mrb[0].mxu0 %v288
    %v1009 = vpop.f32.mrb[0].mxu0
    %v1010 = vadd.f32 %v879, %v1009
    %v1011 = vpop.f32.mrb[0].mxu0
    %1012 = vmatprep.mubr.f32.mxu0 0.0
    %1013 = vmatmul.mubr.f32.gmra.mrb[0].mxu0 %v289
    %v1014 = vpop.f32.mrb[0].mxu0
    %v1015 = vadd.f32 %v880, %v1014
    %v1016 = vpop.f32.mrb[0].mxu0
    %1017 = vmatprep.mubr.f32.mxu0 0.0
    %1018 = vmatmul.mubr.f32.gmra.mrb[0].mxu0 %v290
    %v1019 = vpop.f32.mrb[0].mxu0
    %v1020 = vadd.f32 %v881, %v1019
    %v1021 = vpop.f32.mrb[0].mxu0
    %1022 = vmatprep.mubr.f32.mxu0 0.0
    %1023 = vmatmul.mubr.f32.gmra.mrb[0].mxu0 %v291
    %v1024 = vpop.f32.mrb[0].mxu0
    %v1025 = vadd.f32 %v882, %v1024
    %v1026 = vpop.f32.mrb[0].mxu0
    %1027 = vdwg.mxu0
    %v1028 = vmax.f32 %v950, 0.0
    %v1029 = vmax.f32 %v955, 0.0
    %v1030 = vmax.f32 %v960, 0.0
    %v1031 = vmax.f32 %v965, 0.0
    %v1032 = vmax.f32 %v970, 0.0
    %v1033 = vmax.f32 %v975, 0.0
    %v1034 = vmax.f32 %v980, 0.0
    %v1035 = vmax.f32 %v985, 0.0
    %v1036 = vmax.f32 %v990, 0.0
    %v1037 = vmax.f32 %v995, 0.0
    %v1038 = vmax.f32 %v1000, 0.0
    %v1039 = vmax.f32 %v1005, 0.0
    %v1040 = vmax.f32 %v1010, 0.0
    %v1041 = vmax.f32 %v1015, 0.0
    %v1042 = vmax.f32 %v1020, 0.0
    %v1043 = vmax.f32 %v1025, 0.0
    %v1044 = vlaneseq
    %v1045 = vshrl.u32 %v1044, 7
    %v1046 = vsub.s32 4, %v1045
    %v1047 = vrot.slane %v79, %v1046
    %v1048 = vmul.f32 %v83, %v1047
    %v1049 = vmul.f32 %v88, %v1047
    %v1050 = vmul.f32 %v93, %v1047
    %v1051 = vmul.f32 %v98, %v1047
    %v1052 = vmul.f32 %v103, %v1047
    %v1053 = vmul.f32 %v108, %v1047
    %v1054 = vmul.f32 %v113, %v1047
    %v1055 = vmul.f32 %v118, %v1047
    %v1056 = vmul.f32 %v123, %v1047
    %v1057 = vmul.f32 %v128, %v1047
    %v1058 = vmul.f32 %v133, %v1047
    %v1059 = vmul.f32 %v138, %v1047
    %v1060 = vmul.f32 %v143, %v1047
    %v1061 = vmul.f32 %v148, %v1047
    %v1062 = vmul.f32 %v153, %v1047
    %v1063 = vmul.f32 %v158, %v1047
    %v1064 = vadd.f32 %v1048, %v183
    %v1065 = vadd.f32 %v1049, %v188
    %v1066 = vadd.f32 %v1050, %v193
    %v1067 = vadd.f32 %v1051, %v198
    %v1068 = vadd.f32 %v1052, %v203
    %v1069 = vadd.f32 %v1053, %v208
    %v1070 = vadd.f32 %v1054, %v213
    %v1071 = vadd.f32 %v1055, %v218
    %v1072 = vadd.f32 %v1056, %v223
    %v1073 = vadd.f32 %v1057, %v228
    %v1074 = vadd.f32 %v1058, %v233
    %v1075 = vadd.f32 %v1059, %v238
    %v1076 = vadd.f32 %v1060, %v243
    %v1077 = vadd.f32 %v1061, %v248
    %v1078 = vadd.f32 %v1062, %v253
    %v1079 = vadd.f32 %v1063, %v258
    %1080 = vmatprep.subr.mxu0 0.0
    %1081 = vmatpush1.msra.mxu0 %v1028
    %1082 = vmatprep.subr.mxu0 0.0
    %1083 = vmatpush1.msra.mxu0 %v1029
    %1084 = vmatprep.subr.mxu0 0.0
    %1085 = vmatpush1.msra.mxu0 %v1030
    %1086 = vmatprep.subr.mxu0 0.0
    %1087 = vmatpush1.msra.mxu0 %v1031
    %1088 = vmatprep.subr.mxu0 0.0
    %1089 = vmatpush1.msra.mxu0 %v1032
    %1090 = vmatprep.subr.mxu0 0.0
    %1091 = vmatpush1.msra.mxu0 %v1033
    %1092 = vmatprep.subr.mxu0 0.0
    %1093 = vmatpush1.msra.mxu0 %v1034
    %1094 = vmatprep.subr.mxu0 0.0
    %1095 = vmatpush1.msra.mxu0 %v1035
    %1096 = vmatprep.subr.mxu0 0.0
    %1097 = vmatpush1.msra.mxu0 %v1036
    %1098 = vmatprep.subr.mxu0 0.0
    %1099 = vmatpush1.msra.mxu0 %v1037
    %1100 = vmatprep.subr.mxu0 0.0
    %1101 = vmatpush1.msra.mxu0 %v1038
    %1102 = vmatprep.subr.mxu0 0.0
    %1103 = vmatpush1.msra.mxu0 %v1039
    %1104 = vmatprep.subr.mxu0 0.0
    %1105 = vmatpush1.msra.mxu0 %v1040
    %1106 = vmatprep.subr.mxu0 0.0
    %1107 = vmatpush1.msra.mxu0 %v1041
    %1108 = vmatprep.subr.mxu0 0.0
    %1109 = vmatpush1.msra.mxu0 %v1042
    %1110 = vmatprep.subr.mxu0 0.0
    %1111 = vmatpush1.msra.mxu0 %v1043
    %1112 = vmatprep.subr.mxu0 0.0
    %1113 = vmatpush1.msra.mxu0 0.0
    %1114 = vmatprep.subr.mxu0 0.0
    %1115 = vmatpush1.msra.mxu0 0.0
    %1116 = vmatprep.subr.mxu0 0.0
    %1117 = vmatpush1.msra.mxu0 0.0
    %1118 = vmatprep.subr.mxu0 0.0
    %1119 = vmatpush1.msra.mxu0 0.0
    %1120 = vmatprep.subr.mxu0 0.0
    %1121 = vmatpush1.msra.mxu0 0.0
    %1122 = vmatprep.subr.mxu0 0.0
    %1123 = vmatpush1.msra.mxu0 0.0
    %1124 = vmatprep.subr.mxu0 0.0
    %1125 = vmatpush1.msra.mxu0 0.0
    %1126 = vmatprep.subr.mxu0 0.0
    %1127 = vmatpush1.msra.mxu0 0.0
    %1128 = vmatprep.subr.mxu0 0.0
    %1129 = vmatpush1.msra.mxu0 0.0
    %1130 = vmatprep.subr.mxu0 0.0
    %1131 = vmatpush1.msra.mxu0 0.0
    %1132 = vmatprep.subr.mxu0 0.0
    %1133 = vmatpush1.msra.mxu0 0.0
    %1134 = vmatprep.subr.mxu0 0.0
    %1135 = vmatpush1.msra.mxu0 0.0
    %1136 = vmatprep.subr.mxu0 0.0
    %1137 = vmatpush1.msra.mxu0 0.0
    %1138 = vmatprep.subr.mxu0 0.0
    %1139 = vmatpush1.msra.mxu0 0.0
    %1140 = vmatprep.subr.mxu0 0.0
    %1141 = vmatpush1.msra.mxu0 0.0
    %1142 = vmatprep.subr.mxu0 0.0
    %1143 = vmatpush1.msra.mxu0 0.0
    %1144 = vmatprep.mubr.f32.mxu0 0.0
    %1145 = vmatmul.mubr.f32.gmra.mrb[0].mxu0 %v276
    %v1146 = vpop.f32.mrb[0].mxu0
    %v1147 = vadd.f32 %v1064, %v1146
    %v1148 = vpop.f32.mrb[0].mxu0
    %1149 = vmatprep.mubr.f32.mxu0 0.0
    %1150 = vmatmul.mubr.f32.gmra.mrb[0].mxu0 %v277
    %v1151 = vpop.f32.mrb[0].mxu0
    %v1152 = vadd.f32 %v1065, %v1151
    %v1153 = vpop.f32.mrb[0].mxu0
    %1154 = vmatprep.mubr.f32.mxu0 0.0
    %1155 = vmatmul.mubr.f32.gmra.mrb[0].mxu0 %v278
    %v1156 = vpop.f32.mrb[0].mxu0
    %v1157 = vadd.f32 %v1066, %v1156
    %v1158 = vpop.f32.mrb[0].mxu0
    %1159 = vmatprep.mubr.f32.mxu0 0.0
    %1160 = vmatmul.mubr.f32.gmra.mrb[0].mxu0 %v279
    %v1161 = vpop.f32.mrb[0].mxu0
    %v1162 = vadd.f32 %v1067, %v1161
    %v1163 = vpop.f32.mrb[0].mxu0
    %1164 = vmatprep.mubr.f32.mxu0 0.0
    %1165 = vmatmul.mubr.f32.gmra.mrb[0].mxu0 %v280
    %v1166 = vpop.f32.mrb[0].mxu0
    %v1167 = vadd.f32 %v1068, %v1166
    %v1168 = vpop.f32.mrb[0].mxu0
    %1169 = vmatprep.mubr.f32.mxu0 0.0
    %1170 = vmatmul.mubr.f32.gmra.mrb[0].mxu0 %v281
    %v1171 = vpop.f32.mrb[0].mxu0
    %v1172 = vadd.f32 %v1069, %v1171
    %v1173 = vpop.f32.mrb[0].mxu0
    %1174 = vmatprep.mubr.f32.mxu0 0.0
    %1175 = vmatmul.mubr.f32.gmra.mrb[0].mxu0 %v282
    %v1176 = vpop.f32.mrb[0].mxu0
    %v1177 = vadd.f32 %v1070, %v1176
    %v1178 = vpop.f32.mrb[0].mxu0
    %1179 = vmatprep.mubr.f32.mxu0 0.0
    %1180 = vmatmul.mubr.f32.gmra.mrb[0].mxu0 %v283
    %v1181 = vpop.f32.mrb[0].mxu0
    %v1182 = vadd.f32 %v1071, %v1181
    %v1183 = vpop.f32.mrb[0].mxu0
    %1184 = vmatprep.mubr.f32.mxu0 0.0
    %1185 = vmatmul.mubr.f32.gmra.mrb[0].mxu0 %v284
    %v1186 = vpop.f32.mrb[0].mxu0
    %v1187 = vadd.f32 %v1072, %v1186
    %v1188 = vpop.f32.mrb[0].mxu0
    %1189 = vmatprep.mubr.f32.mxu0 0.0
    %1190 = vmatmul.mubr.f32.gmra.mrb[0].mxu0 %v285
    %v1191 = vpop.f32.mrb[0].mxu0
    %v1192 = vadd.f32 %v1073, %v1191
    %v1193 = vpop.f32.mrb[0].mxu0
    %1194 = vmatprep.mubr.f32.mxu0 0.0
    %1195 = vmatmul.mubr.f32.gmra.mrb[0].mxu0 %v286
    %v1196 = vpop.f32.mrb[0].mxu0
    %v1197 = vadd.f32 %v1074, %v1196
    %v1198 = vpop.f32.mrb[0].mxu0
    %1199 = vmatprep.mubr.f32.mxu0 0.0
    %1200 = vmatmul.mubr.f32.gmra.mrb[0].mxu0 %v287
    %v1201 = vpop.f32.mrb[0].mxu0
    %v1202 = vadd.f32 %v1075, %v1201
    %v1203 = vpop.f32.mrb[0].mxu0
    %1204 = vmatprep.mubr.f32.mxu0 0.0
    %1205 = vmatmul.mubr.f32.gmra.mrb[0].mxu0 %v288
    %v1206 = vpop.f32.mrb[0].mxu0
    %v1207 = vadd.f32 %v1076, %v1206
    %v1208 = vpop.f32.mrb[0].mxu0
    %1209 = vmatprep.mubr.f32.mxu0 0.0
    %1210 = vmatmul.mubr.f32.gmra.mrb[0].mxu0 %v289
    %v1211 = vpop.f32.mrb[0].mxu0
    %v1212 = vadd.f32 %v1077, %v1211
    %v1213 = vpop.f32.mrb[0].mxu0
    %1214 = vmatprep.mubr.f32.mxu0 0.0
    %1215 = vmatmul.mubr.f32.gmra.mrb[0].mxu0 %v290
    %v1216 = vpop.f32.mrb[0].mxu0
    %v1217 = vadd.f32 %v1078, %v1216
    %v1218 = vpop.f32.mrb[0].mxu0
    %1219 = vmatprep.mubr.f32.mxu0 0.0
    %1220 = vmatmul.mubr.f32.gmra.mrb[0].mxu0 %v291
    %v1221 = vpop.f32.mrb[0].mxu0
    %v1222 = vadd.f32 %v1079, %v1221
    %v1223 = vpop.f32.mrb[0].mxu0
    %1224 = vdwg.mxu0
    %v1225 = vmax.f32 %v1147, 0.0
    %v1226 = vmax.f32 %v1152, 0.0
    %v1227 = vmax.f32 %v1157, 0.0
    %v1228 = vmax.f32 %v1162, 0.0
    %v1229 = vmax.f32 %v1167, 0.0
    %v1230 = vmax.f32 %v1172, 0.0
    %v1231 = vmax.f32 %v1177, 0.0
    %v1232 = vmax.f32 %v1182, 0.0
    %v1233 = vmax.f32 %v1187, 0.0
    %v1234 = vmax.f32 %v1192, 0.0
    %v1235 = vmax.f32 %v1197, 0.0
    %v1236 = vmax.f32 %v1202, 0.0
    %v1237 = vmax.f32 %v1207, 0.0
    %v1238 = vmax.f32 %v1212, 0.0
    %v1239 = vmax.f32 %v1217, 0.0
    %v1240 = vmax.f32 %v1222, 0.0
    %v1241 = vlaneseq
    %v1242 = vshrl.u32 %v1241, 7
    %v1243 = vsub.s32 5, %v1242
    %v1244 = vrot.slane %v79, %v1243
    %v1245 = vmul.f32 %v83, %v1244
    %v1246 = vmul.f32 %v88, %v1244
    %v1247 = vmul.f32 %v93, %v1244
    %v1248 = vmul.f32 %v98, %v1244
    %v1249 = vmul.f32 %v103, %v1244
    %v1250 = vmul.f32 %v108, %v1244
    %v1251 = vmul.f32 %v113, %v1244
    %v1252 = vmul.f32 %v118, %v1244
    %v1253 = vmul.f32 %v123, %v1244
    %v1254 = vmul.f32 %v128, %v1244
    %v1255 = vmul.f32 %v133, %v1244
    %v1256 = vmul.f32 %v138, %v1244
    %v1257 = vmul.f32 %v143, %v1244
    %v1258 = vmul.f32 %v148, %v1244
    %v1259 = vmul.f32 %v153, %v1244
    %v1260 = vmul.f32 %v158, %v1244
    %v1261 = vadd.f32 %v1245, %v183
    %v1262 = vadd.f32 %v1246, %v188
    %v1263 = vadd.f32 %v1247, %v193
    %v1264 = vadd.f32 %v1248, %v198
    %v1265 = vadd.f32 %v1249, %v203
    %v1266 = vadd.f32 %v1250, %v208
    %v1267 = vadd.f32 %v1251, %v213
    %v1268 = vadd.f32 %v1252, %v218
    %v1269 = vadd.f32 %v1253, %v223
    %v1270 = vadd.f32 %v1254, %v228
    %v1271 = vadd.f32 %v1255, %v233
    %v1272 = vadd.f32 %v1256, %v238
    %v1273 = vadd.f32 %v1257, %v243
    %v1274 = vadd.f32 %v1258, %v248
    %v1275 = vadd.f32 %v1259, %v253
    %v1276 = vadd.f32 %v1260, %v258
    %1277 = vmatprep.subr.mxu0 0.0
    %1278 = vmatpush1.msra.mxu0 %v1225
    %1279 = vmatprep.subr.mxu0 0.0
    %1280 = vmatpush1.msra.mxu0 %v1226
    %1281 = vmatprep.subr.mxu0 0.0
    %1282 = vmatpush1.msra.mxu0 %v1227
    %1283 = vmatprep.subr.mxu0 0.0
    %1284 = vmatpush1.msra.mxu0 %v1228
    %1285 = vmatprep.subr.mxu0 0.0
    %1286 = vmatpush1.msra.mxu0 %v1229
    %1287 = vmatprep.subr.mxu0 0.0
    %1288 = vmatpush1.msra.mxu0 %v1230
    %1289 = vmatprep.subr.mxu0 0.0
    %1290 = vmatpush1.msra.mxu0 %v1231
    %1291 = vmatprep.subr.mxu0 0.0
    %1292 = vmatpush1.msra.mxu0 %v1232
    %1293 = vmatprep.subr.mxu0 0.0
    %1294 = vmatpush1.msra.mxu0 %v1233
    %1295 = vmatprep.subr.mxu0 0.0
    %1296 = vmatpush1.msra.mxu0 %v1234
    %1297 = vmatprep.subr.mxu0 0.0
    %1298 = vmatpush1.msra.mxu0 %v1235
    %1299 = vmatprep.subr.mxu0 0.0
    %1300 = vmatpush1.msra.mxu0 %v1236
    %1301 = vmatprep.subr.mxu0 0.0
    %1302 = vmatpush1.msra.mxu0 %v1237
    %1303 = vmatprep.subr.mxu0 0.0
    %1304 = vmatpush1.msra.mxu0 %v1238
    %1305 = vmatprep.subr.mxu0 0.0
    %1306 = vmatpush1.msra.mxu0 %v1239
    %1307 = vmatprep.subr.mxu0 0.0
    %1308 = vmatpush1.msra.mxu0 %v1240
    %1309 = vmatprep.subr.mxu0 0.0
    %1310 = vmatpush1.msra.mxu0 0.0
    %1311 = vmatprep.subr.mxu0 0.0
    %1312 = vmatpush1.msra.mxu0 0.0
    %1313 = vmatprep.subr.mxu0 0.0
    %1314 = vmatpush1.msra.mxu0 0.0
    %1315 = vmatprep.subr.mxu0 0.0
    %1316 = vmatpush1.msra.mxu0 0.0
    %1317 = vmatprep.subr.mxu0 0.0
    %1318 = vmatpush1.msra.mxu0 0.0
    %1319 = vmatprep.subr.mxu0 0.0
    %1320 = vmatpush1.msra.mxu0 0.0
    %1321 = vmatprep.subr.mxu0 0.0
    %1322 = vmatpush1.msra.mxu0 0.0
    %1323 = vmatprep.subr.mxu0 0.0
    %1324 = vmatpush1.msra.mxu0 0.0
    %1325 = vmatprep.subr.mxu0 0.0
    %1326 = vmatpush1.msra.mxu0 0.0
    %1327 = vmatprep.subr.mxu0 0.0
    %1328 = vmatpush1.msra.mxu0 0.0
    %1329 = vmatprep.subr.mxu0 0.0
    %1330 = vmatpush1.msra.mxu0 0.0
    %1331 = vmatprep.subr.mxu0 0.0
    %1332 = vmatpush1.msra.mxu0 0.0
    %1333 = vmatprep.subr.mxu0 0.0
    %1334 = vmatpush1.msra.mxu0 0.0
    %1335 = vmatprep.subr.mxu0 0.0
    %1336 = vmatpush1.msra.mxu0 0.0
    %1337 = vmatprep.subr.mxu0 0.0
    %1338 = vmatpush1.msra.mxu0 0.0
    %1339 = vmatprep.subr.mxu0 0.0
    %1340 = vmatpush1.msra.mxu0 0.0
    %1341 = vmatprep.mubr.f32.mxu0 0.0
    %1342 = vmatmul.mubr.f32.gmra.mrb[0].mxu0 %v276
    %v1343 = vpop.f32.mrb[0].mxu0
    %v1344 = vadd.f32 %v1261, %v1343
    %v1345 = vpop.f32.mrb[0].mxu0
    %1346 = vmatprep.mubr.f32.mxu0 0.0
    %1347 = vmatmul.mubr.f32.gmra.mrb[0].mxu0 %v277
    %v1348 = vpop.f32.mrb[0].mxu0
    %v1349 = vadd.f32 %v1262, %v1348
    %v1350 = vpop.f32.mrb[0].mxu0
    %1351 = vmatprep.mubr.f32.mxu0 0.0
    %1352 = vmatmul.mubr.f32.gmra.mrb[0].mxu0 %v278
    %v1353 = vpop.f32.mrb[0].mxu0
    %v1354 = vadd.f32 %v1263, %v1353
    %v1355 = vpop.f32.mrb[0].mxu0
    %1356 = vmatprep.mubr.f32.mxu0 0.0
    %1357 = vmatmul.mubr.f32.gmra.mrb[0].mxu0 %v279
    %v1358 = vpop.f32.mrb[0].mxu0
    %v1359 = vadd.f32 %v1264, %v1358
    %v1360 = vpop.f32.mrb[0].mxu0
    %1361 = vmatprep.mubr.f32.mxu0 0.0
    %1362 = vmatmul.mubr.f32.gmra.mrb[0].mxu0 %v280
    %v1363 = vpop.f32.mrb[0].mxu0
    %v1364 = vadd.f32 %v1265, %v1363
    %v1365 = vpop.f32.mrb[0].mxu0
    %1366 = vmatprep.mubr.f32.mxu0 0.0
    %1367 = vmatmul.mubr.f32.gmra.mrb[0].mxu0 %v281
    %v1368 = vpop.f32.mrb[0].mxu0
    %v1369 = vadd.f32 %v1266, %v1368
    %v1370 = vpop.f32.mrb[0].mxu0
    %1371 = vmatprep.mubr.f32.mxu0 0.0
    %1372 = vmatmul.mubr.f32.gmra.mrb[0].mxu0 %v282
    %v1373 = vpop.f32.mrb[0].mxu0
    %v1374 = vadd.f32 %v1267, %v1373
    %v1375 = vpop.f32.mrb[0].mxu0
    %1376 = vmatprep.mubr.f32.mxu0 0.0
    %1377 = vmatmul.mubr.f32.gmra.mrb[0].mxu0 %v283
    %v1378 = vpop.f32.mrb[0].mxu0
    %v1379 = vadd.f32 %v1268, %v1378
    %v1380 = vpop.f32.mrb[0].mxu0
    %1381 = vmatprep.mubr.f32.mxu0 0.0
    %1382 = vmatmul.mubr.f32.gmra.mrb[0].mxu0 %v284
    %v1383 = vpop.f32.mrb[0].mxu0
    %v1384 = vadd.f32 %v1269, %v1383
    %v1385 = vpop.f32.mrb[0].mxu0
    %1386 = vmatprep.mubr.f32.mxu0 0.0
    %1387 = vmatmul.mubr.f32.gmra.mrb[0].mxu0 %v285
    %v1388 = vpop.f32.mrb[0].mxu0
    %v1389 = vadd.f32 %v1270, %v1388
    %v1390 = vpop.f32.mrb[0].mxu0
    %1391 = vmatprep.mubr.f32.mxu0 0.0
    %1392 = vmatmul.mubr.f32.gmra.mrb[0].mxu0 %v286
    %v1393 = vpop.f32.mrb[0].mxu0
    %v1394 = vadd.f32 %v1271, %v1393
    %v1395 = vpop.f32.mrb[0].mxu0
    %1396 = vmatprep.mubr.f32.mxu0 0.0
    %1397 = vmatmul.mubr.f32.gmra.mrb[0].mxu0 %v287
    %v1398 = vpop.f32.mrb[0].mxu0
    %v1399 = vadd.f32 %v1272, %v1398
    %v1400 = vpop.f32.mrb[0].mxu0
    %1401 = vmatprep.mubr.f32.mxu0 0.0
    %1402 = vmatmul.mubr.f32.gmra.mrb[0].mxu0 %v288
    %v1403 = vpop.f32.mrb[0].mxu0
    %v1404 = vadd.f32 %v1273, %v1403
    %v1405 = vpop.f32.mrb[0].mxu0
    %1406 = vmatprep.mubr.f32.mxu0 0.0
    %1407 = vmatmul.mubr.f32.gmra.mrb[0].mxu0 %v289
    %v1408 = vpop.f32.mrb[0].mxu0
    %v1409 = vadd.f32 %v1274, %v1408
    %v1410 = vpop.f32.mrb[0].mxu0
    %1411 = vmatprep.mubr.f32.mxu0 0.0
    %1412 = vmatmul.mubr.f32.gmra.mrb[0].mxu0 %v290
    %v1413 = vpop.f32.mrb[0].mxu0
    %v1414 = vadd.f32 %v1275, %v1413
    %v1415 = vpop.f32.mrb[0].mxu0
    %1416 = vmatprep.mubr.f32.mxu0 0.0
    %1417 = vmatmul.mubr.f32.gmra.mrb[0].mxu0 %v291
    %v1418 = vpop.f32.mrb[0].mxu0
    %v1419 = vadd.f32 %v1276, %v1418
    %v1420 = vpop.f32.mrb[0].mxu0
    %1421 = vdwg.mxu0
    %v1422 = vmax.f32 %v1344, 0.0
    %v1423 = vmax.f32 %v1349, 0.0
    %v1424 = vmax.f32 %v1354, 0.0
    %v1425 = vmax.f32 %v1359, 0.0
    %v1426 = vmax.f32 %v1364, 0.0
    %v1427 = vmax.f32 %v1369, 0.0
    %v1428 = vmax.f32 %v1374, 0.0
    %v1429 = vmax.f32 %v1379, 0.0
    %v1430 = vmax.f32 %v1384, 0.0
    %v1431 = vmax.f32 %v1389, 0.0
    %v1432 = vmax.f32 %v1394, 0.0
    %v1433 = vmax.f32 %v1399, 0.0
    %v1434 = vmax.f32 %v1404, 0.0
    %v1435 = vmax.f32 %v1409, 0.0
    %v1436 = vmax.f32 %v1414, 0.0
    %v1437 = vmax.f32 %v1419, 0.0
    %v1438 = vlaneseq
    %v1439 = vshrl.u32 %v1438, 7
    %v1440 = vsub.s32 6, %v1439
    %v1441 = vrot.slane %v79, %v1440
    %v1442 = vmul.f32 %v83, %v1441
    %v1443 = vmul.f32 %v88, %v1441
    %v1444 = vmul.f32 %v93, %v1441
    %v1445 = vmul.f32 %v98, %v1441
    %v1446 = vmul.f32 %v103, %v1441
    %v1447 = vmul.f32 %v108, %v1441
    %v1448 = vmul.f32 %v113, %v1441
    %v1449 = vmul.f32 %v118, %v1441
    %v1450 = vmul.f32 %v123, %v1441
    %v1451 = vmul.f32 %v128, %v1441
    %v1452 = vmul.f32 %v133, %v1441
    %v1453 = vmul.f32 %v138, %v1441
    %v1454 = vmul.f32 %v143, %v1441
    %v1455 = vmul.f32 %v148, %v1441
    %v1456 = vmul.f32 %v153, %v1441
    %v1457 = vmul.f32 %v158, %v1441
    %v1458 = vadd.f32 %v1442, %v183
    %v1459 = vadd.f32 %v1443, %v188
    %v1460 = vadd.f32 %v1444, %v193
    %v1461 = vadd.f32 %v1445, %v198
    %v1462 = vadd.f32 %v1446, %v203
    %v1463 = vadd.f32 %v1447, %v208
    %v1464 = vadd.f32 %v1448, %v213
    %v1465 = vadd.f32 %v1449, %v218
    %v1466 = vadd.f32 %v1450, %v223
    %v1467 = vadd.f32 %v1451, %v228
    %v1468 = vadd.f32 %v1452, %v233
    %v1469 = vadd.f32 %v1453, %v238
    %v1470 = vadd.f32 %v1454, %v243
    %v1471 = vadd.f32 %v1455, %v248
    %v1472 = vadd.f32 %v1456, %v253
    %v1473 = vadd.f32 %v1457, %v258
    %1474 = vmatprep.subr.mxu0 0.0
    %1475 = vmatpush1.msra.mxu0 %v1422
    %1476 = vmatprep.subr.mxu0 0.0
    %1477 = vmatpush1.msra.mxu0 %v1423
    %1478 = vmatprep.subr.mxu0 0.0
    %1479 = vmatpush1.msra.mxu0 %v1424
    %1480 = vmatprep.subr.mxu0 0.0
    %1481 = vmatpush1.msra.mxu0 %v1425
    %1482 = vmatprep.subr.mxu0 0.0
    %1483 = vmatpush1.msra.mxu0 %v1426
    %1484 = vmatprep.subr.mxu0 0.0
    %1485 = vmatpush1.msra.mxu0 %v1427
    %1486 = vmatprep.subr.mxu0 0.0
    %1487 = vmatpush1.msra.mxu0 %v1428
    %1488 = vmatprep.subr.mxu0 0.0
    %1489 = vmatpush1.msra.mxu0 %v1429
    %1490 = vmatprep.subr.mxu0 0.0
    %1491 = vmatpush1.msra.mxu0 %v1430
    %1492 = vmatprep.subr.mxu0 0.0
    %1493 = vmatpush1.msra.mxu0 %v1431
    %1494 = vmatprep.subr.mxu0 0.0
    %1495 = vmatpush1.msra.mxu0 %v1432
    %1496 = vmatprep.subr.mxu0 0.0
    %1497 = vmatpush1.msra.mxu0 %v1433
    %1498 = vmatprep.subr.mxu0 0.0
    %1499 = vmatpush1.msra.mxu0 %v1434
    %1500 = vmatprep.subr.mxu0 0.0
    %1501 = vmatpush1.msra.mxu0 %v1435
    %1502 = vmatprep.subr.mxu0 0.0
    %1503 = vmatpush1.msra.mxu0 %v1436
    %1504 = vmatprep.subr.mxu0 0.0
    %1505 = vmatpush1.msra.mxu0 %v1437
    %1506 = vmatprep.subr.mxu0 0.0
    %1507 = vmatpush1.msra.mxu0 0.0
    %1508 = vmatprep.subr.mxu0 0.0
    %1509 = vmatpush1.msra.mxu0 0.0
    %1510 = vmatprep.subr.mxu0 0.0
    %1511 = vmatpush1.msra.mxu0 0.0
    %1512 = vmatprep.subr.mxu0 0.0
    %1513 = vmatpush1.msra.mxu0 0.0
    %1514 = vmatprep.subr.mxu0 0.0
    %1515 = vmatpush1.msra.mxu0 0.0
    %1516 = vmatprep.subr.mxu0 0.0
    %1517 = vmatpush1.msra.mxu0 0.0
    %1518 = vmatprep.subr.mxu0 0.0
    %1519 = vmatpush1.msra.mxu0 0.0
    %1520 = vmatprep.subr.mxu0 0.0
    %1521 = vmatpush1.msra.mxu0 0.0
    %1522 = vmatprep.subr.mxu0 0.0
    %1523 = vmatpush1.msra.mxu0 0.0
    %1524 = vmatprep.subr.mxu0 0.0
    %1525 = vmatpush1.msra.mxu0 0.0
    %1526 = vmatprep.subr.mxu0 0.0
    %1527 = vmatpush1.msra.mxu0 0.0
    %1528 = vmatprep.subr.mxu0 0.0
    %1529 = vmatpush1.msra.mxu0 0.0
    %1530 = vmatprep.subr.mxu0 0.0
    %1531 = vmatpush1.msra.mxu0 0.0
    %1532 = vmatprep.subr.mxu0 0.0
    %1533 = vmatpush1.msra.mxu0 0.0
    %1534 = vmatprep.subr.mxu0 0.0
    %1535 = vmatpush1.msra.mxu0 0.0
    %1536 = vmatprep.subr.mxu0 0.0
    %1537 = vmatpush1.msra.mxu0 0.0
    %1538 = vmatprep.mubr.f32.mxu0 0.0
    %1539 = vmatmul.mubr.f32.gmra.mrb[0].mxu0 %v276
    %v1540 = vpop.f32.mrb[0].mxu0
    %v1541 = vadd.f32 %v1458, %v1540
    %v1542 = vpop.f32.mrb[0].mxu0
    %1543 = vmatprep.mubr.f32.mxu0 0.0
    %1544 = vmatmul.mubr.f32.gmra.mrb[0].mxu0 %v277
    %v1545 = vpop.f32.mrb[0].mxu0
    %v1546 = vadd.f32 %v1459, %v1545
    %v1547 = vpop.f32.mrb[0].mxu0
    %1548 = vmatprep.mubr.f32.mxu0 0.0
    %1549 = vmatmul.mubr.f32.gmra.mrb[0].mxu0 %v278
    %v1550 = vpop.f32.mrb[0].mxu0
    %v1551 = vadd.f32 %v1460, %v1550
    %v1552 = vpop.f32.mrb[0].mxu0
    %1553 = vmatprep.mubr.f32.mxu0 0.0
    %1554 = vmatmul.mubr.f32.gmra.mrb[0].mxu0 %v279
    %v1555 = vpop.f32.mrb[0].mxu0
    %v1556 = vadd.f32 %v1461, %v1555
    %v1557 = vpop.f32.mrb[0].mxu0
    %1558 = vmatprep.mubr.f32.mxu0 0.0
    %1559 = vmatmul.mubr.f32.gmra.mrb[0].mxu0 %v280
    %v1560 = vpop.f32.mrb[0].mxu0
    %v1561 = vadd.f32 %v1462, %v1560
    %v1562 = vpop.f32.mrb[0].mxu0
    %1563 = vmatprep.mubr.f32.mxu0 0.0
    %1564 = vmatmul.mubr.f32.gmra.mrb[0].mxu0 %v281
    %v1565 = vpop.f32.mrb[0].mxu0
    %v1566 = vadd.f32 %v1463, %v1565
    %v1567 = vpop.f32.mrb[0].mxu0
    %1568 = vmatprep.mubr.f32.mxu0 0.0
    %1569 = vmatmul.mubr.f32.gmra.mrb[0].mxu0 %v282
    %v1570 = vpop.f32.mrb[0].mxu0
    %v1571 = vadd.f32 %v1464, %v1570
    %v1572 = vpop.f32.mrb[0].mxu0
    %1573 = vmatprep.mubr.f32.mxu0 0.0
    %1574 = vmatmul.mubr.f32.gmra.mrb[0].mxu0 %v283
    %v1575 = vpop.f32.mrb[0].mxu0
    %v1576 = vadd.f32 %v1465, %v1575
    %v1577 = vpop.f32.mrb[0].mxu0
    %1578 = vmatprep.mubr.f32.mxu0 0.0
    %1579 = vmatmul.mubr.f32.gmra.mrb[0].mxu0 %v284
    %v1580 = vpop.f32.mrb[0].mxu0
    %v1581 = vadd.f32 %v1466, %v1580
    %v1582 = vpop.f32.mrb[0].mxu0
    %1583 = vmatprep.mubr.f32.mxu0 0.0
    %1584 = vmatmul.mubr.f32.gmra.mrb[0].mxu0 %v285
    %v1585 = vpop.f32.mrb[0].mxu0
    %v1586 = vadd.f32 %v1467, %v1585
    %v1587 = vpop.f32.mrb[0].mxu0
    %1588 = vmatprep.mubr.f32.mxu0 0.0
    %1589 = vmatmul.mubr.f32.gmra.mrb[0].mxu0 %v286
    %v1590 = vpop.f32.mrb[0].mxu0
    %v1591 = vadd.f32 %v1468, %v1590
    %v1592 = vpop.f32.mrb[0].mxu0
    %1593 = vmatprep.mubr.f32.mxu0 0.0
    %1594 = vmatmul.mubr.f32.gmra.mrb[0].mxu0 %v287
    %v1595 = vpop.f32.mrb[0].mxu0
    %v1596 = vadd.f32 %v1469, %v1595
    %v1597 = vpop.f32.mrb[0].mxu0
    %1598 = vmatprep.mubr.f32.mxu0 0.0
    %1599 = vmatmul.mubr.f32.gmra.mrb[0].mxu0 %v288
    %v1600 = vpop.f32.mrb[0].mxu0
    %v1601 = vadd.f32 %v1470, %v1600
    %v1602 = vpop.f32.mrb[0].mxu0
    %1603 = vmatprep.mubr.f32.mxu0 0.0
    %1604 = vmatmul.mubr.f32.gmra.mrb[0].mxu0 %v289
    %v1605 = vpop.f32.mrb[0].mxu0
    %v1606 = vadd.f32 %v1471, %v1605
    %v1607 = vpop.f32.mrb[0].mxu0
    %1608 = vmatprep.mubr.f32.mxu0 0.0
    %1609 = vmatmul.mubr.f32.gmra.mrb[0].mxu0 %v290
    %v1610 = vpop.f32.mrb[0].mxu0
    %v1611 = vadd.f32 %v1472, %v1610
    %v1612 = vpop.f32.mrb[0].mxu0
    %1613 = vmatprep.mubr.f32.mxu0 0.0
    %1614 = vmatmul.mubr.f32.gmra.mrb[0].mxu0 %v291
    %v1615 = vpop.f32.mrb[0].mxu0
    %v1616 = vadd.f32 %v1473, %v1615
    %v1617 = vpop.f32.mrb[0].mxu0
    %1618 = vdwg.mxu0
    %v1619 = vmax.f32 %v1541, 0.0
    %v1620 = vmax.f32 %v1546, 0.0
    %v1621 = vmax.f32 %v1551, 0.0
    %v1622 = vmax.f32 %v1556, 0.0
    %v1623 = vmax.f32 %v1561, 0.0
    %v1624 = vmax.f32 %v1566, 0.0
    %v1625 = vmax.f32 %v1571, 0.0
    %v1626 = vmax.f32 %v1576, 0.0
    %v1627 = vmax.f32 %v1581, 0.0
    %v1628 = vmax.f32 %v1586, 0.0
    %v1629 = vmax.f32 %v1591, 0.0
    %v1630 = vmax.f32 %v1596, 0.0
    %v1631 = vmax.f32 %v1601, 0.0
    %v1632 = vmax.f32 %v1606, 0.0
    %v1633 = vmax.f32 %v1611, 0.0
    %v1634 = vmax.f32 %v1616, 0.0
    %v1635 = vlaneseq
    %v1636 = vshrl.u32 %v1635, 7
    %v1637 = vsub.s32 7, %v1636
    %v1638 = vrot.slane %v79, %v1637
    %v1639 = vmul.f32 %v83, %v1638
    %v1640 = vmul.f32 %v88, %v1638
    %v1641 = vmul.f32 %v93, %v1638
    %v1642 = vmul.f32 %v98, %v1638
    %v1643 = vmul.f32 %v103, %v1638
    %v1644 = vmul.f32 %v108, %v1638
    %v1645 = vmul.f32 %v113, %v1638
    %v1646 = vmul.f32 %v118, %v1638
    %v1647 = vmul.f32 %v123, %v1638
    %v1648 = vmul.f32 %v128, %v1638
    %v1649 = vmul.f32 %v133, %v1638
    %v1650 = vmul.f32 %v138, %v1638
    %v1651 = vmul.f32 %v143, %v1638
    %v1652 = vmul.f32 %v148, %v1638
    %v1653 = vmul.f32 %v153, %v1638
    %v1654 = vmul.f32 %v158, %v1638
    %v1655 = vadd.f32 %v1639, %v183
    %v1656 = vadd.f32 %v1640, %v188
    %v1657 = vadd.f32 %v1641, %v193
    %v1658 = vadd.f32 %v1642, %v198
    %v1659 = vadd.f32 %v1643, %v203
    %v1660 = vadd.f32 %v1644, %v208
    %v1661 = vadd.f32 %v1645, %v213
    %v1662 = vadd.f32 %v1646, %v218
    %v1663 = vadd.f32 %v1647, %v223
    %v1664 = vadd.f32 %v1648, %v228
    %v1665 = vadd.f32 %v1649, %v233
    %v1666 = vadd.f32 %v1650, %v238
    %v1667 = vadd.f32 %v1651, %v243
    %v1668 = vadd.f32 %v1652, %v248
    %v1669 = vadd.f32 %v1653, %v253
    %v1670 = vadd.f32 %v1654, %v258
    %1671 = vmatprep.subr.mxu0 0.0
    %1672 = vmatpush1.msra.mxu0 %v1619
    %1673 = vmatprep.subr.mxu0 0.0
    %1674 = vmatpush1.msra.mxu0 %v1620
    %1675 = vmatprep.subr.mxu0 0.0
    %1676 = vmatpush1.msra.mxu0 %v1621
    %1677 = vmatprep.subr.mxu0 0.0
    %1678 = vmatpush1.msra.mxu0 %v1622
    %1679 = vmatprep.subr.mxu0 0.0
    %1680 = vmatpush1.msra.mxu0 %v1623
    %1681 = vmatprep.subr.mxu0 0.0
    %1682 = vmatpush1.msra.mxu0 %v1624
    %1683 = vmatprep.subr.mxu0 0.0
    %1684 = vmatpush1.msra.mxu0 %v1625
    %1685 = vmatprep.subr.mxu0 0.0
    %1686 = vmatpush1.msra.mxu0 %v1626
    %1687 = vmatprep.subr.mxu0 0.0
    %1688 = vmatpush1.msra.mxu0 %v1627
    %1689 = vmatprep.subr.mxu0 0.0
    %1690 = vmatpush1.msra.mxu0 %v1628
    %1691 = vmatprep.subr.mxu0 0.0
    %1692 = vmatpush1.msra.mxu0 %v1629
    %1693 = vmatprep.subr.mxu0 0.0
    %1694 = vmatpush1.msra.mxu0 %v1630
    %1695 = vmatprep.subr.mxu0 0.0
    %1696 = vmatpush1.msra.mxu0 %v1631
    %1697 = vmatprep.subr.mxu0 0.0
    %1698 = vmatpush1.msra.mxu0 %v1632
    %1699 = vmatprep.subr.mxu0 0.0
    %1700 = vmatpush1.msra.mxu0 %v1633
    %1701 = vmatprep.subr.mxu0 0.0
    %1702 = vmatpush1.msra.mxu0 %v1634
    %1703 = vmatprep.subr.mxu0 0.0
    %1704 = vmatpush1.msra.mxu0 0.0
    %1705 = vmatprep.subr.mxu0 0.0
    %1706 = vmatpush1.msra.mxu0 0.0
    %1707 = vmatprep.subr.mxu0 0.0
    %1708 = vmatpush1.msra.mxu0 0.0
    %1709 = vmatprep.subr.mxu0 0.0
    %1710 = vmatpush1.msra.mxu0 0.0
    %1711 = vmatprep.subr.mxu0 0.0
    %1712 = vmatpush1.msra.mxu0 0.0
    %1713 = vmatprep.subr.mxu0 0.0
    %1714 = vmatpush1.msra.mxu0 0.0
    %1715 = vmatprep.subr.mxu0 0.0
    %1716 = vmatpush1.msra.mxu0 0.0
    %1717 = vmatprep.subr.mxu0 0.0
    %1718 = vmatpush1.msra.mxu0 0.0
    %1719 = vmatprep.subr.mxu0 0.0
    %1720 = vmatpush1.msra.mxu0 0.0
    %1721 = vmatprep.subr.mxu0 0.0
    %1722 = vmatpush1.msra.mxu0 0.0
    %1723 = vmatprep.subr.mxu0 0.0
    %1724 = vmatpush1.msra.mxu0 0.0
    %1725 = vmatprep.subr.mxu0 0.0
    %1726 = vmatpush1.msra.mxu0 0.0
    %1727 = vmatprep.subr.mxu0 0.0
    %1728 = vmatpush1.msra.mxu0 0.0
    %1729 = vmatprep.subr.mxu0 0.0
    %1730 = vmatpush1.msra.mxu0 0.0
    %1731 = vmatprep.subr.mxu0 0.0
    %1732 = vmatpush1.msra.mxu0 0.0
    %1733 = vmatprep.subr.mxu0 0.0
    %1734 = vmatpush1.msra.mxu0 0.0
    %1735 = vmatprep.mubr.f32.mxu0 0.0
    %1736 = vmatmul.mubr.f32.gmra.mrb[0].mxu0 %v276
    %v1737 = vpop.f32.mrb[0].mxu0
    %v1738 = vadd.f32 %v1655, %v1737
    %v1739 = vpop.f32.mrb[0].mxu0
    %1740 = vmatprep.mubr.f32.mxu0 0.0
    %1741 = vmatmul.mubr.f32.gmra.mrb[0].mxu0 %v277
    %v1742 = vpop.f32.mrb[0].mxu0
    %v1743 = vadd.f32 %v1656, %v1742
    %v1744 = vpop.f32.mrb[0].mxu0
    %1745 = vmatprep.mubr.f32.mxu0 0.0
    %1746 = vmatmul.mubr.f32.gmra.mrb[0].mxu0 %v278
    %v1747 = vpop.f32.mrb[0].mxu0
    %v1748 = vadd.f32 %v1657, %v1747
    %v1749 = vpop.f32.mrb[0].mxu0
    %1750 = vmatprep.mubr.f32.mxu0 0.0
    %1751 = vmatmul.mubr.f32.gmra.mrb[0].mxu0 %v279
    %v1752 = vpop.f32.mrb[0].mxu0
    %v1753 = vadd.f32 %v1658, %v1752
    %v1754 = vpop.f32.mrb[0].mxu0
    %1755 = vmatprep.mubr.f32.mxu0 0.0
    %1756 = vmatmul.mubr.f32.gmra.mrb[0].mxu0 %v280
    %v1757 = vpop.f32.mrb[0].mxu0
    %v1758 = vadd.f32 %v1659, %v1757
    %v1759 = vpop.f32.mrb[0].mxu0
    %1760 = vmatprep.mubr.f32.mxu0 0.0
    %1761 = vmatmul.mubr.f32.gmra.mrb[0].mxu0 %v281
    %v1762 = vpop.f32.mrb[0].mxu0
    %v1763 = vadd.f32 %v1660, %v1762
    %v1764 = vpop.f32.mrb[0].mxu0
    %1765 = vmatprep.mubr.f32.mxu0 0.0
    %1766 = vmatmul.mubr.f32.gmra.mrb[0].mxu0 %v282
    %v1767 = vpop.f32.mrb[0].mxu0
    %v1768 = vadd.f32 %v1661, %v1767
    %v1769 = vpop.f32.mrb[0].mxu0
    %1770 = vmatprep.mubr.f32.mxu0 0.0
    %1771 = vmatmul.mubr.f32.gmra.mrb[0].mxu0 %v283
    %v1772 = vpop.f32.mrb[0].mxu0
    %v1773 = vadd.f32 %v1662, %v1772
    %v1774 = vpop.f32.mrb[0].mxu0
    %1775 = vmatprep.mubr.f32.mxu0 0.0
    %1776 = vmatmul.mubr.f32.gmra.mrb[0].mxu0 %v284
    %v1777 = vpop.f32.mrb[0].mxu0
    %v1778 = vadd.f32 %v1663, %v1777
    %v1779 = vpop.f32.mrb[0].mxu0
    %1780 = vmatprep.mubr.f32.mxu0 0.0
    %1781 = vmatmul.mubr.f32.gmra.mrb[0].mxu0 %v285
    %v1782 = vpop.f32.mrb[0].mxu0
    %v1783 = vadd.f32 %v1664, %v1782
    %v1784 = vpop.f32.mrb[0].mxu0
    %1785 = vmatprep.mubr.f32.mxu0 0.0
    %1786 = vmatmul.mubr.f32.gmra.mrb[0].mxu0 %v286
    %v1787 = vpop.f32.mrb[0].mxu0
    %v1788 = vadd.f32 %v1665, %v1787
    %v1789 = vpop.f32.mrb[0].mxu0
    %1790 = vmatprep.mubr.f32.mxu0 0.0
    %1791 = vmatmul.mubr.f32.gmra.mrb[0].mxu0 %v287
    %v1792 = vpop.f32.mrb[0].mxu0
    %v1793 = vadd.f32 %v1666, %v1792
    %v1794 = vpop.f32.mrb[0].mxu0
    %1795 = vmatprep.mubr.f32.mxu0 0.0
    %1796 = vmatmul.mubr.f32.gmra.mrb[0].mxu0 %v288
    %v1797 = vpop.f32.mrb[0].mxu0
    %v1798 = vadd.f32 %v1667, %v1797
    %v1799 = vpop.f32.mrb[0].mxu0
    %1800 = vmatprep.mubr.f32.mxu0 0.0
    %1801 = vmatmul.mubr.f32.gmra.mrb[0].mxu0 %v289
    %v1802 = vpop.f32.mrb[0].mxu0
    %v1803 = vadd.f32 %v1668, %v1802
    %v1804 = vpop.f32.mrb[0].mxu0
    %1805 = vmatprep.mubr.f32.mxu0 0.0
    %1806 = vmatmul.mubr.f32.gmra.mrb[0].mxu0 %v290
    %v1807 = vpop.f32.mrb[0].mxu0
    %v1808 = vadd.f32 %v1669, %v1807
    %v1809 = vpop.f32.mrb[0].mxu0
    %1810 = vmatprep.mubr.f32.mxu0 0.0
    %1811 = vmatmul.mubr.f32.gmra.mrb[0].mxu0 %v291
    %v1812 = vpop.f32.mrb[0].mxu0
    %v1813 = vadd.f32 %v1670, %v1812
    %v1814 = vpop.f32.mrb[0].mxu0
    %1815 = vdwg.mxu0
    %v1816 = vmax.f32 %v1738, 0.0
    %v1817 = vmax.f32 %v1743, 0.0
    %v1818 = vmax.f32 %v1748, 0.0
    %v1819 = vmax.f32 %v1753, 0.0
    %v1820 = vmax.f32 %v1758, 0.0
    %v1821 = vmax.f32 %v1763, 0.0
    %v1822 = vmax.f32 %v1768, 0.0
    %v1823 = vmax.f32 %v1773, 0.0
    %v1824 = vmax.f32 %v1778, 0.0
    %v1825 = vmax.f32 %v1783, 0.0
    %v1826 = vmax.f32 %v1788, 0.0
    %v1827 = vmax.f32 %v1793, 0.0
    %v1828 = vmax.f32 %v1798, 0.0
    %v1829 = vmax.f32 %v1803, 0.0
    %v1830 = vmax.f32 %v1808, 0.0
    %v1831 = vmax.f32 %v1813, 0.0
  $region30: #{mnist_irnn_forward.1} parent=0 // loop_footer
    %s60 = sadd.s32 1, %s56
  $region31: #{mnist_irnn_forward.1} parent=0 // loop_footer_branch
    %55 = sbr.rel target = $region27
  $region32: #{mnist_irnn_forward.1} parent=0 // loop_exit
    _
  %v1832 = vld [vmem:[%s4] sm:$0xff]
  %v1833 = vld [vmem:[%s4 + $0x8] sm:$0xff]
  %v1834 = vld [vmem:[%s4 + $0x10] sm:$0xff]
  %v1835 = vld [vmem:[%s4 + $0x18] sm:$0xff]
  %v1836 = vld [vmem:[%s4 + $0x20] sm:$0xff]
  %v1837 = vld [vmem:[%s4 + $0x28] sm:$0xff]
  %v1838 = vld [vmem:[%s4 + $0x30] sm:$0xff]
  %v1839 = vld [vmem:[%s4 + $0x38] sm:$0xff]
  %v1840 = vld [vmem:[%s4 + $0x40] sm:$0xff]
  %v1841 = vld [vmem:[%s4 + $0x48] sm:$0xff]
  %v1842 = vld [vmem:[%s4 + $0x50] sm:$0xff]
  %v1843 = vld [vmem:[%s4 + $0x58] sm:$0xff]
  %v1844 = vld [vmem:[%s4 + $0x60] sm:$0xff]
  %v1845 = vld [vmem:[%s4 + $0x68] sm:$0xff]
  %v1846 = vld [vmem:[%s4 + $0x70] sm:$0xff]
  %v1847 = vld [vmem:[%s4 + $0x78] sm:$0xff]
  %v1848 = vld [vmem:[%s5] sm:$0xff]
  %v1849 = vld [vmem:[%s5 + $0x8] sm:$0xff]
  %v1850 = vld [vmem:[%s5 + $0x10] sm:$0xff]
  %v1851 = vld [vmem:[%s5 + $0x18] sm:$0xff]
  %v1852 = vld [vmem:[%s5 + $0x20] sm:$0xff]
  %v1853 = vld [vmem:[%s5 + $0x28] sm:$0xff]
  %v1854 = vld [vmem:[%s5 + $0x30] sm:$0xff]
  %v1855 = vld [vmem:[%s5 + $0x38] sm:$0xff]
  %v1856 = vld [vmem:[%s5 + $0x40] sm:$0xff]
  %v1857 = vld [vmem:[%s5 + $0x48] sm:$0xff]
  %v1858 = vld [vmem:[%s5 + $0x50] sm:$0xff]
  %v1859 = vld [vmem:[%s5 + $0x58] sm:$0xff]
  %v1860 = vld [vmem:[%s5 + $0x60] sm:$0xff]
  %v1861 = vld [vmem:[%s5 + $0x68] sm:$0xff]
  %v1862 = vld [vmem:[%s5 + $0x70] sm:$0xff]
  %v1863 = vld [vmem:[%s5 + $0x78] sm:$0xff]
  %1865 = vset.pattern.permute.xlu0 0
  %1866 = vperm.xlu0 %1865, %v1848
  %v1867 = vpop.permute.xlu0 %1866
  %1870 = vset.pattern.permute.xlu0 0
  %1871 = vperm.xlu0 %1870, %v1849
  %v1872 = vpop.permute.xlu0 %1871
  %1875 = vset.pattern.permute.xlu0 0
  %1876 = vperm.xlu0 %1875, %v1850
  %v1877 = vpop.permute.xlu0 %1876
  %1880 = vset.pattern.permute.xlu0 0
  %1881 = vperm.xlu0 %1880, %v1851
  %v1882 = vpop.permute.xlu0 %1881
  %1885 = vset.pattern.permute.xlu0 0
  %1886 = vperm.xlu0 %1885, %v1852
  %v1887 = vpop.permute.xlu0 %1886
  %1890 = vset.pattern.permute.xlu0 0
  %1891 = vperm.xlu0 %1890, %v1853
  %v1892 = vpop.permute.xlu0 %1891
  %1895 = vset.pattern.permute.xlu0 0
  %1896 = vperm.xlu0 %1895, %v1854
  %v1897 = vpop.permute.xlu0 %1896
  %1900 = vset.pattern.permute.xlu0 0
  %1901 = vperm.xlu0 %1900, %v1855
  %v1902 = vpop.permute.xlu0 %1901
  %1905 = vset.pattern.permute.xlu0 0
  %1906 = vperm.xlu0 %1905, %v1856
  %v1907 = vpop.permute.xlu0 %1906
  %1910 = vset.pattern.permute.xlu0 0
  %1911 = vperm.xlu0 %1910, %v1857
  %v1912 = vpop.permute.xlu0 %1911
  %1915 = vset.pattern.permute.xlu0 0
  %1916 = vperm.xlu0 %1915, %v1858
  %v1917 = vpop.permute.xlu0 %1916
  %1920 = vset.pattern.permute.xlu0 0
  %1921 = vperm.xlu0 %1920, %v1859
  %v1922 = vpop.permute.xlu0 %1921
  %1925 = vset.pattern.permute.xlu0 0
  %1926 = vperm.xlu0 %1925, %v1860
  %v1927 = vpop.permute.xlu0 %1926
  %1930 = vset.pattern.permute.xlu0 0
  %1931 = vperm.xlu0 %1930, %v1861
  %v1932 = vpop.permute.xlu0 %1931
  %1935 = vset.pattern.permute.xlu0 0
  %1936 = vperm.xlu0 %1935, %v1862
  %v1937 = vpop.permute.xlu0 %1936
  %1940 = vset.pattern.permute.xlu0 0
  %1941 = vperm.xlu0 %1940, %v1863
  %v1942 = vpop.permute.xlu0 %1941
  %1944 = vmatprep.subr.mxu0 0.0
  %1945 = vmatpush1.msra.mxu0 %v61
  %1946 = vmatprep.subr.mxu0 0.0
  %1947 = vmatpush1.msra.mxu0 %v62
  %1948 = vmatprep.subr.mxu0 0.0
  %1949 = vmatpush1.msra.mxu0 %v63
  %1950 = vmatprep.subr.mxu0 0.0
  %1951 = vmatpush1.msra.mxu0 %v64
  %1952 = vmatprep.subr.mxu0 0.0
  %1953 = vmatpush1.msra.mxu0 %v65
  %1954 = vmatprep.subr.mxu0 0.0
  %1955 = vmatpush1.msra.mxu0 %v66
  %1956 = vmatprep.subr.mxu0 0.0
  %1957 = vmatpush1.msra.mxu0 %v67
  %1958 = vmatprep.subr.mxu0 0.0
  %1959 = vmatpush1.msra.mxu0 %v68
  %1960 = vmatprep.subr.mxu0 0.0
  %1961 = vmatpush1.msra.mxu0 %v69
  %1962 = vmatprep.subr.mxu0 0.0
  %1963 = vmatpush1.msra.mxu0 %v70
  %1964 = vmatprep.subr.mxu0 0.0
  %1965 = vmatpush1.msra.mxu0 %v71
  %1966 = vmatprep.subr.mxu0 0.0
  %1967 = vmatpush1.msra.mxu0 %v72
  %1968 = vmatprep.subr.mxu0 0.0
  %1969 = vmatpush1.msra.mxu0 %v73
  %1970 = vmatprep.subr.mxu0 0.0
  %1971 = vmatpush1.msra.mxu0 %v74
  %1972 = vmatprep.subr.mxu0 0.0
  %1973 = vmatpush1.msra.mxu0 %v75
  %1974 = vmatprep.subr.mxu0 0.0
  %1975 = vmatpush1.msra.mxu0 %v76
  %1976 = vmatprep.subr.mxu0 0.0
  %1977 = vmatpush1.msra.mxu0 0.0
  %1978 = vmatprep.subr.mxu0 0.0
  %1979 = vmatpush1.msra.mxu0 0.0
  %1980 = vmatprep.subr.mxu0 0.0
  %1981 = vmatpush1.msra.mxu0 0.0
  %1982 = vmatprep.subr.mxu0 0.0
  %1983 = vmatpush1.msra.mxu0 0.0
  %1984 = vmatprep.subr.mxu0 0.0
  %1985 = vmatpush1.msra.mxu0 0.0
  %1986 = vmatprep.subr.mxu0 0.0
  %1987 = vmatpush1.msra.mxu0 0.0
  %1988 = vmatprep.subr.mxu0 0.0
  %1989 = vmatpush1.msra.mxu0 0.0
  %1990 = vmatprep.subr.mxu0 0.0
  %1991 = vmatpush1.msra.mxu0 0.0
  %1992 = vmatprep.subr.mxu0 0.0
  %1993 = vmatpush1.msra.mxu0 0.0
  %1994 = vmatprep.subr.mxu0 0.0
  %1995 = vmatpush1.msra.mxu0 0.0
  %1996 = vmatprep.subr.mxu0 0.0
  %1997 = vmatpush1.msra.mxu0 0.0
  %1998 = vmatprep.subr.mxu0 0.0
  %1999 = vmatpush1.msra.mxu0 0.0
  %2000 = vmatprep.subr.mxu0 0.0
  %2001 = vmatpush1.msra.mxu0 0.0
  %2002 = vmatprep.subr.mxu0 0.0
  %2003 = vmatpush1.msra.mxu0 0.0
  %2004 = vmatprep.subr.mxu0 0.0
  %2005 = vmatpush1.msra.mxu0 0.0
  %2006 = vmatprep.subr.mxu0 0.0
  %2007 = vmatpush1.msra.mxu0 0.0
  %2008 = vmatprep.mubr.f32.mxu0 0.0
  %2009 = vmatmul.mubr.f32.gmra.mrb[0].mxu0 %v1832
  %v2010 = vpop.f32.mrb[0].mxu0
  %v2011 = vadd.f32 %v1867, %v2010
  %v2012 = vpop.f32.mrb[0].mxu0
  %2013 = vmatprep.mubr.f32.mxu0 0.0
  %2014 = vmatmul.mubr.f32.gmra.mrb[0].mxu0 %v1833
  %v2015 = vpop.f32.mrb[0].mxu0
  %v2016 = vadd.f32 %v1872, %v2015
  %v2017 = vpop.f32.mrb[0].mxu0
  %2018 = vmatprep.mubr.f32.mxu0 0.0
  %2019 = vmatmul.mubr.f32.gmra.mrb[0].mxu0 %v1834
  %v2020 = vpop.f32.mrb[0].mxu0
  %v2021 = vadd.f32 %v1877, %v2020
  %v2022 = vpop.f32.mrb[0].mxu0
  %2023 = vmatprep.mubr.f32.mxu0 0.0
  %2024 = vmatmul.mubr.f32.gmra.mrb[0].mxu0 %v1835
  %v2025 = vpop.f32.mrb[0].mxu0
  %v2026 = vadd.f32 %v1882, %v2025
  %v2027 = vpop.f32.mrb[0].mxu0
  %2028 = vmatprep.mubr.f32.mxu0 0.0
  %2029 = vmatmul.mubr.f32.gmra.mrb[0].mxu0 %v1836
  %v2030 = vpop.f32.mrb[0].mxu0
  %v2031 = vadd.f32 %v1887, %v2030
  %v2032 = vpop.f32.mrb[0].mxu0
  %2033 = vmatprep.mubr.f32.mxu0 0.0
  %2034 = vmatmul.mubr.f32.gmra.mrb[0].mxu0 %v1837
  %v2035 = vpop.f32.mrb[0].mxu0
  %v2036 = vadd.f32 %v1892, %v2035
  %v2037 = vpop.f32.mrb[0].mxu0
  %2038 = vmatprep.mubr.f32.mxu0 0.0
  %2039 = vmatmul.mubr.f32.gmra.mrb[0].mxu0 %v1838
  %v2040 = vpop.f32.mrb[0].mxu0
  %v2041 = vadd.f32 %v1897, %v2040
  %v2042 = vpop.f32.mrb[0].mxu0
  %2043 = vmatprep.mubr.f32.mxu0 0.0
  %2044 = vmatmul.mubr.f32.gmra.mrb[0].mxu0 %v1839
  %v2045 = vpop.f32.mrb[0].mxu0
  %v2046 = vadd.f32 %v1902, %v2045
  %v2047 = vpop.f32.mrb[0].mxu0
  %2048 = vmatprep.mubr.f32.mxu0 0.0
  %2049 = vmatmul.mubr.f32.gmra.mrb[0].mxu0 %v1840
  %v2050 = vpop.f32.mrb[0].mxu0
  %v2051 = vadd.f32 %v1907, %v2050
  %v2052 = vpop.f32.mrb[0].mxu0
  %2053 = vmatprep.mubr.f32.mxu0 0.0
  %2054 = vmatmul.mubr.f32.gmra.mrb[0].mxu0 %v1841
  %v2055 = vpop.f32.mrb[0].mxu0
  %v2056 = vadd.f32 %v1912, %v2055
  %v2057 = vpop.f32.mrb[0].mxu0
  %2058 = vmatprep.mubr.f32.mxu0 0.0
  %2059 = vmatmul.mubr.f32.gmra.mrb[0].mxu0 %v1842
  %v2060 = vpop.f32.mrb[0].mxu0
  %v2061 = vadd.f32 %v1917, %v2060
  %v2062 = vpop.f32.mrb[0].mxu0
  %2063 = vmatprep.mubr.f32.mxu0 0.0
  %2064 = vmatmul.mubr.f32.gmra.mrb[0].mxu0 %v1843
  %v2065 = vpop.f32.mrb[0].mxu0
  %v2066 = vadd.f32 %v1922, %v2065
  %v2067 = vpop.f32.mrb[0].mxu0
  %2068 = vmatprep.mubr.f32.mxu0 0.0
  %2069 = vmatmul.mubr.f32.gmra.mrb[0].mxu0 %v1844
  %v2070 = vpop.f32.mrb[0].mxu0
  %v2071 = vadd.f32 %v1927, %v2070
  %v2072 = vpop.f32.mrb[0].mxu0
  %2073 = vmatprep.mubr.f32.mxu0 0.0
  %2074 = vmatmul.mubr.f32.gmra.mrb[0].mxu0 %v1845
  %v2075 = vpop.f32.mrb[0].mxu0
  %v2076 = vadd.f32 %v1932, %v2075
  %v2077 = vpop.f32.mrb[0].mxu0
  %2078 = vmatprep.mubr.f32.mxu0 0.0
  %2079 = vmatmul.mubr.f32.gmra.mrb[0].mxu0 %v1846
  %v2080 = vpop.f32.mrb[0].mxu0
  %v2081 = vadd.f32 %v1937, %v2080
  %v2082 = vpop.f32.mrb[0].mxu0
  %2083 = vmatprep.mubr.f32.mxu0 0.0
  %2084 = vmatmul.mubr.f32.gmra.mrb[0].mxu0 %v1847
  %v2085 = vpop.f32.mrb[0].mxu0
  %v2086 = vadd.f32 %v1942, %v2085
  %v2087 = vpop.f32.mrb[0].mxu0
  %2088 = vdwg.mxu0
  %vm2089 = vcmask 64512
  %v2090 = vsel %vm2089, %v2011, -inf
  %v2091 = vsel %vm2089, %v2016, -inf
  %v2092 = vsel %vm2089, %v2021, -inf
  %v2093 = vsel %vm2089, %v2026, -inf
  %v2094 = vsel %vm2089, %v2031, -inf
  %v2095 = vmax.f32 %v2090, %v2094
  %v2096 = vsel %vm2089, %v2036, -inf
  %v2097 = vmax.f32 %v2091, %v2096
  %v2098 = vsel %vm2089, %v2041, -inf
  %v2099 = vmax.f32 %v2092, %v2098
  %v2100 = vsel %vm2089, %v2046, -inf
  %v2101 = vmax.f32 %v2093, %v2100
  %v2102 = vsel %vm2089, %v2051, -inf
  %v2103 = vmax.f32 %v2095, %v2102
  %v2104 = vsel %vm2089, %v2056, -inf
  %v2105 = vmax.f32 %v2097, %v2104
  %v2106 = vsel %vm2089, %v2061, -inf
  %v2107 = vmax.f32 %v2099, %v2106
  %v2108 = vsel %vm2089, %v2066, -inf
  %v2109 = vmax.f32 %v2101, %v2108
  %v2110 = vsel %vm2089, %v2071, -inf
  %v2111 = vmax.f32 %v2103, %v2110
  %v2112 = vsel %vm2089, %v2076, -inf
  %v2113 = vmax.f32 %v2105, %v2112
  %v2114 = vsel %vm2089, %v2081, -inf
  %v2115 = vmax.f32 %v2107, %v2114
  %v2116 = vsel %vm2089, %v2086, -inf
  %v2117 = vmax.f32 %v2109, %v2116
  %v2118 = vmax.f32 %v2111, %v2113
  %v2119 = vmax.f32 %v2115, %v2117
  %v2120 = vmax.f32 %v2118, %v2119
  %v2121 = vrot.slane %v2120, 4
  %v2122 = vmax.f32 %v2120, %v2121
  %v2123 = vrot.slane %v2122, 2
  %v2124 = vmax.f32 %v2122, %v2123
  %v2125 = vrot.slane %v2124, 1
  %v2126 = vmax.f32 %v2124, %v2125
  %v2127 = vsub.f32 %v2011, %v2126
  %v2128 = vsub.f32 %v2016, %v2126
  %v2129 = vsub.f32 %v2021, %v2126
  %v2130 = vsub.f32 %v2026, %v2126
  %v2131 = vsub.f32 %v2031, %v2126
  %v2132 = vsub.f32 %v2036, %v2126
  %v2133 = vsub.f32 %v2041, %v2126
  %v2134 = vsub.f32 %v2046, %v2126
  %v2135 = vsub.f32 %v2051, %v2126
  %v2136 = vsub.f32 %v2056, %v2126
  %v2137 = vsub.f32 %v2061, %v2126
  %v2138 = vsub.f32 %v2066, %v2126
  %v2139 = vsub.f32 %v2071, %v2126
  %v2140 = vsub.f32 %v2076, %v2126
  %v2141 = vsub.f32 %v2081, %v2126
  %v2142 = vsub.f32 %v2086, %v2126
  %v2143 = vmul.f32 %v2127, 1.442695
  %v2144 = vpow.pop %v2143
  %v2145 = vmul.f32 %v2128, 1.442695
  %v2146 = vpow.pop %v2145
  %v2147 = vmul.f32 %v2129, 1.442695
  %v2148 = vpow.pop %v2147
  %v2149 = vmul.f32 %v2130, 1.442695
  %v2150 = vpow.pop %v2149
  %v2151 = vmul.f32 %v2131, 1.442695
  %v2152 = vpow.pop %v2151
  %v2153 = vmul.f32 %v2132, 1.442695
  %v2154 = vpow.pop %v2153
  %v2155 = vmul.f32 %v2133, 1.442695
  %v2156 = vpow.pop %v2155
  %v2157 = vmul.f32 %v2134, 1.442695
  %v2158 = vpow.pop %v2157
  %v2159 = vmul.f32 %v2135, 1.442695
  %v2160 = vpow.pop %v2159
  %v2161 = vmul.f32 %v2136, 1.442695
  %v2162 = vpow.pop %v2161
  %v2163 = vmul.f32 %v2137, 1.442695
  %v2164 = vpow.pop %v2163
  %v2165 = vmul.f32 %v2138, 1.442695
  %v2166 = vpow.pop %v2165
  %v2167 = vmul.f32 %v2139, 1.442695
  %v2168 = vpow.pop %v2167
  %v2169 = vmul.f32 %v2140, 1.442695
  %v2170 = vpow.pop %v2169
  %v2171 = vmul.f32 %v2141, 1.442695
  %v2172 = vpow.pop %v2171
  %v2173 = vmul.f32 %v2142, 1.442695
  %v2174 = vpow.pop %v2173
  %v2175 = vsel %vm2089, %v2144, 0.0
  %v2176 = vsel %vm2089, %v2146, 0.0
  %v2177 = vadd.f32 %v2175, %v2176
  %v2178 = vsel %vm2089, %v2148, 0.0
  %v2179 = vadd.f32 %v2177, %v2178
  %v2180 = vsel %vm2089, %v2150, 0.0
  %v2181 = vadd.f32 %v2179, %v2180
  %v2182 = vsel %vm2089, %v2152, 0.0
  %v2183 = vadd.f32 %v2181, %v2182
  %v2184 = vsel %vm2089, %v2154, 0.0
  %v2185 = vadd.f32 %v2183, %v2184
  %v2186 = vsel %vm2089, %v2156, 0.0
  %v2187 = vadd.f32 %v2185, %v2186
  %v2188 = vsel %vm2089, %v2158, 0.0
  %v2189 = vadd.f32 %v2187, %v2188
  %v2190 = vsel %vm2089, %v2160, 0.0
  %v2191 = vadd.f32 %v2189, %v2190
  %v2192 = vsel %vm2089, %v2162, 0.0
  %v2193 = vadd.f32 %v2191, %v2192
  %v2194 = vsel %vm2089, %v2164, 0.0
  %v2195 = vadd.f32 %v2193, %v2194
  %v2196 = vsel %vm2089, %v2166, 0.0
  %v2197 = vadd.f32 %v2195, %v2196
  %v2198 = vsel %vm2089, %v2168, 0.0
  %v2199 = vadd.f32 %v2197, %v2198
  %v2200 = vsel %vm2089, %v2170, 0.0
  %v2201 = vadd.f32 %v2199, %v2200
  %v2202 = vsel %vm2089, %v2172, 0.0
  %v2203 = vadd.f32 %v2201, %v2202
  %v2204 = vsel %vm2089, %v2174, 0.0
  %v2205 = vadd.f32 %v2203, %v2204
  %v2206 = vrot.slane %v2205, 4
  %v2207 = vadd.f32 %v2205, %v2206
  %v2208 = vrot.slane %v2207, 2
  %v2209 = vadd.f32 %v2207, %v2208
  %v2210 = vrot.slane %v2209, 1
  %v2211 = vadd.f32 %v2209, %v2210
  %v2212 = vlog2.pop %v2211
  %v2213 = vmul.f32 %v2212, 0.6931472
  %v2214 = vsub.f32 %v2127, %v2213
  %v2215 = vsub.f32 %v2128, %v2213
  %v2216 = vsub.f32 %v2129, %v2213
  %v2217 = vsub.f32 %v2130, %v2213
  %v2218 = vsub.f32 %v2131, %v2213
  %v2219 = vsub.f32 %v2132, %v2213
  %v2220 = vsub.f32 %v2133, %v2213
  %v2221 = vsub.f32 %v2134, %v2213
  %v2222 = vsub.f32 %v2135, %v2213
  %v2223 = vsub.f32 %v2136, %v2213
  %v2224 = vsub.f32 %v2137, %v2213
  %v2225 = vsub.f32 %v2138, %v2213
  %v2226 = vsub.f32 %v2139, %v2213
  %v2227 = vsub.f32 %v2140, %v2213
  %v2228 = vsub.f32 %v2141, %v2213
  %v2229 = vsub.f32 %v2142, %v2213
  %2230 = vst.msk [vmem:[%s6] sm:$0xff] %vm2089, %v2214
  %2231 = vst.msk [vmem:[%s6 + $0x8] sm:$0xff] %vm2089, %v2215
  %2232 = vst.msk [vmem:[%s6 + $0x10] sm:$0xff] %vm2089, %v2216
  %2233 = vst.msk [vmem:[%s6 + $0x18] sm:$0xff] %vm2089, %v2217
  %2234 = vst.msk [vmem:[%s6 + $0x20] sm:$0xff] %vm2089, %v2218
  %2235 = vst.msk [vmem:[%s6 + $0x28] sm:$0xff] %vm2089, %v2219
  %2236 = vst.msk [vmem:[%s6 + $0x30] sm:$0xff] %vm2089, %v2220
  %2237 = vst.msk [vmem:[%s6 + $0x38] sm:$0xff] %vm2089, %v2221
  %2238 = vst.msk [vmem:[%s6 + $0x40] sm:$0xff] %vm2089, %v2222
  %2239 = vst.msk [vmem:[%s6 + $0x48] sm:$0xff] %vm2089, %v2223
  %2240 = vst.msk [vmem:[%s6 + $0x50] sm:$0xff] %vm2089, %v2224
  %2241 = vst.msk [vmem:[%s6 + $0x58] sm:$0xff] %vm2089, %v2225
  %2242 = vst.msk [vmem:[%s6 + $0x60] sm:$0xff] %vm2089, %v2226
  %2243 = vst.msk [vmem:[%s6 + $0x68] sm:$0xff] %vm2089, %v2227
  %2244 = vst.msk [vmem:[%s6 + $0x70] sm:$0xff] %vm2089, %v2228
  %2245 = vst.msk [vmem:[%s6 + $0x78] sm:$0xff] %vm2089, %v2229
  // Predicated region
  $region33: #{mnist_irnn_forward.1} parent=0 // pred_check
    _
  $region34: #{mnist_irnn_forward.1} parent=0 // pred_check_branch
    %2247 = sbr.rel (0) target = $region36
  $region35: #{mnist_irnn_forward.1} parent=0 // pred_region
    _
  $region36: #{mnist_irnn_forward.1} parent=0 // pred_fallthru
    _
  // Predicated region
  $region37: #{mnist_irnn_forward.1} parent=0 // pred_check
    _
  $region38: #{mnist_irnn_forward.1} parent=0 // pred_check_branch
    %2249 = sbr.rel (0) target = $region40
  $region39: #{mnist_irnn_forward.1} parent=0 // pred_region
    _
  $region40: #{mnist_irnn_forward.1} parent=0 // pred_fallthru
    _

</llo_original>
